<compile_context>
chip_gen: v5e
topology: v5e:2x2
jax: 0.10.0
libtpu: 0.0.40
codegen_flags: <defaults>
</compile_context>

<pallas_src>
import math
from functools import partial

import jax
import jax.numpy as jnp
from jax.experimental import pallas as pl
from jax.experimental.pallas import tpu as pltpu


# ----------------------------------------------------------------------------
# Pallas kernels
# ----------------------------------------------------------------------------
def _conv_relu_pool_kernel(p_ref, w_ref, b_ref, o_ref):
    """Fused conv (as matmul) + bias + ReLU + 2x2 maxpool.

    p_ref: (4, K, M)  patches, one slab per pool-window sub-position
    w_ref: (C_out, K) reshaped conv weight
    b_ref: (C_out, 1) bias column
    o_ref: (C_out, M) pooled, ReLU'd output (M = B*Hp*Wp on the lane axis)
    """
    w = w_ref[...]
    y = jnp.dot(w, p_ref[0], preferred_element_type=jnp.float32)
    for q in range(1, 4):
        yq = jnp.dot(w, p_ref[q], preferred_element_type=jnp.float32)
        y = jnp.maximum(y, yq)          # elementwise pool on the VPU
    # relu(max_q(y_q) + b) == max_q(relu(y_q + b)) since bias is q-invariant.
    o_ref[...] = jnp.maximum(y + b_ref[...], 0.0)


def _mlp_kernel(f_ref, w1_ref, b1_ref, w2_ref, b2_ref, w3_ref, b3_ref, o_ref,
                *, scale):
    """Fused fc1+ReLU -> fc2+ReLU -> MuReadout. h1/h2 stay in VMEM/vregs."""
    h = jnp.dot(f_ref[...], w1_ref[...], preferred_element_type=jnp.float32)
    h = jnp.maximum(h + b1_ref[...], 0.0)
    h = jnp.dot(h, w2_ref[...], preferred_element_type=jnp.float32)
    h = jnp.maximum(h + b2_ref[...], 0.0)
    if scale != 1.0:                    # static: skipped entirely when 1.0
        h = h * scale
    o_ref[...] = jnp.dot(h, w3_ref[...],
                         preferred_element_type=jnp.float32) + b3_ref[...]


# ----------------------------------------------------------------------------
# Wrappers
# ----------------------------------------------------------------------------
def _pick_lane_tile(m, max_tile=2048):
    """Largest lane tile (multiple of 128) dividing m, else the full extent."""
    if m <= max_tile:
        return m
    for t in (2048, 1024, 512, 256, 128):
        if m % t == 0:
            return t
    return m  # fallback: single (possibly large) block


def _pool_phase_patches(xc, k):
    """Strided im2col for a k x k VALID conv followed by a 2x2/2 maxpool.

    xc: (C, B, H, W) channel-major input.
    Returns (patches, (B, Hp, Wp)) with patches of shape
    (4, C*k*k, B*Hp*Wp); leading axis = pool-window sub-position (di, dj).
    Feature order along K is (c, ki, kj), matching weight.reshape(C_out, -1).
    """
    C, B, H, W = xc.shape
    Ho, Wo = H - k + 1, W - k + 1
    Hp, Wp = Ho // 2, Wo // 2
    cols = []
    for di in range(2):
        for dj in range(2):
            sl = []
            for ki in range(k):
                for kj in range(k):
                    h0, w0 = di + ki, dj + kj
                    sl.append(xc[:, :, h0:h0 + 2 * Hp:2, w0:w0 + 2 * Wp:2])
            col = jnp.stack(sl, axis=1)               # (C, k*k, B, Hp, Wp)
            cols.append(col.reshape(C * k * k, B * Hp * Wp))
    return jnp.stack(cols, axis=0), (B, Hp, Wp)


def conv_relu_pool_pallas(xc, w, b, *, k=5):
    """xc: (C_in, B, H, W); w: (C_out, C_in*k*k); b: (C_out, 1).

    Returns the pooled, ReLU'd activation in channel-major layout
    (C_out, B, Hp, Wp) so the next conv needs no transpose.
    """
    c_out, kk = w.shape
    patches, (B, Hp, Wp) = _pool_phase_patches(xc, k)
    m = B * Hp * Wp
    tile = _pick_lane_tile(m)
    grid = (m // tile,)

    out = pl.pallas_call(
        _conv_relu_pool_kernel,
        out_shape=jax.ShapeDtypeStruct((c_out, m), jnp.float32),
        grid=grid,
        in_specs=[
            pl.BlockSpec((4, kk, tile), lambda i: (0, 0, i)),
            pl.BlockSpec((c_out, kk), lambda i: (0, 0)),
            pl.BlockSpec((c_out, 1), lambda i: (0, 0)),
        ],
        out_specs=pl.BlockSpec((c_out, tile), lambda i: (0, i)),
        compiler_params=pltpu.CompilerParams(
            dimension_semantics=("parallel",)),
    )(patches, w, b)
    return out.reshape(c_out, B, Hp, Wp)


def _full_spec(shape):
    return pl.BlockSpec(shape, lambda: (0,) * len(shape))


def mlp_pallas(f, w1, b1, w2, b2, w3, b3, *, scale=1.0):
    """f: (B, 400) -> logits (B, 10). Weights as (K, N), biases as (1, N)."""
    B = f.shape[0]
    N = w3.shape[1]
    args = (f, w1, b1, w2, b2, w3, b3)
    return pl.pallas_call(
        partial(_mlp_kernel, scale=float(scale)),
        out_shape=jax.ShapeDtypeStruct((B, N), jnp.float32),
        in_specs=[_full_spec(a.shape) for a in args],
        out_specs=_full_spec((B, N)),
    )(*args)


# ----------------------------------------------------------------------------
# Model
# ----------------------------------------------------------------------------
WIDTH = 120
FC2_OUT = int(WIDTH * 0.5)
NUM_CLASSES = 10
# MuReadout forward is Linear(output_mult * x / width_mult()).
# TODO(synk): width_mult depends on mup set_base_shapes; with base width ==
# model width it is 1.0 (output_mult defaults to 1.0).
MU_OUTPUT_MULT = 1.0
MU_WIDTH_MULT = 1.0
assert MU_WIDTH_MULT > 0.0, "mup width_mult must be positive"


def init_params(key, width=WIDTH):
    ks = jax.random.split(key, 8)

    def u(k, shape, fan_in):
        bound = 1.0 / math.sqrt(fan_in)
        return jax.random.uniform(k, shape, jnp.float32, -bound, bound)

    fc2_out = int(width * 0.5)
    return {
        "conv1_w": u(ks[0], (6, 3, 5, 5), 3 * 25),
        "conv1_b": u(ks[1], (6,), 3 * 25),
        "conv2_w": u(ks[2], (16, 6, 5, 5), 6 * 25),
        "conv2_b": u(ks[3], (16,), 6 * 25),
        "fc1_w": u(ks[4], (width, 16 * 5 * 5), 16 * 5 * 5),
        "fc1_b": u(ks[5], (width,), 16 * 5 * 5),
        "fc2_w": u(ks[6], (fc2_out, width), width),
        "fc2_b": u(ks[7], (fc2_out,), width),
        # MuReadout(readout_zero_init=True): weight and bias start at zero.
        "fc3_w": jnp.zeros((NUM_CLASSES, fc2_out), jnp.float32),
        "fc3_b": jnp.zeros((NUM_CLASSES,), jnp.float32),
    }


def model_forward(x, p):
    """x: (B, 3, 32, 32) f32 NCHW -> logits (B, 10)."""
    B = x.shape[0]

    # conv1 + ReLU + 2x2 pool  (single fused Pallas kernel, lane-dense output)
    xc = jnp.transpose(x, (1, 0, 2, 3))                       # (3, B, 32, 32)
    y1 = conv_relu_pool_pallas(
        xc, p["conv1_w"].reshape(6, -1), p["conv1_b"].reshape(6, 1))
    # y1: (6, B, 14, 14) channel-major -> feeds conv2 with no transpose.

    # conv2 + ReLU + 2x2 pool
    y2 = conv_relu_pool_pallas(
        y1, p["conv2_w"].reshape(16, -1), p["conv2_b"].reshape(16, 1))
    # y2: (16, B, 5, 5)

    # rearrange 'b c h w -> b (c h w)'  (tiny transpose; matches PyTorch order)
    f = jnp.transpose(y2, (1, 0, 2, 3)).reshape(B, 16 * 5 * 5)

    # fc1 + ReLU + fc2 + ReLU + MuReadout, fused into one kernel.
    return mlp_pallas(
        f,
        p["fc1_w"].T, p["fc1_b"][None, :],
        p["fc2_w"].T, p["fc2_b"][None, :],
        p["fc3_w"].T, p["fc3_b"][None, :],
        scale=MU_OUTPUT_MULT / MU_WIDTH_MULT,
    )


# ----------------------------------------------------------------------------
# Pure-JAX reference (for validation)
# ----------------------------------------------------------------------------
def ref_forward(x, p):
    def conv(z, w, b):
        y = jax.lax.conv_general_dilated(
            z, w, (1, 1), "VALID", dimension_numbers=("NCHW", "OIHW", "NCHW"))
        return y + b[None, :, None, None]

    def pool(z):
        return jax.lax.reduce_window(
            z, -jnp.inf, jax.lax.max, (1, 1, 2, 2), (1, 1, 2, 2), "VALID")

    y = pool(jax.nn.relu(conv(x, p["conv1_w"], p["conv1_b"])))
    y = pool(jax.nn.relu(conv(y, p["conv2_w"], p["conv2_b"])))
    f = y.reshape(x.shape[0], -1)
    h1 = jax.nn.relu(f @ p["fc1_w"].T + p["fc1_b"])
    h2 = jax.nn.relu(h1 @ p["fc2_w"].T + p["fc2_b"])
    return (h2 * (MU_OUTPUT_MULT / MU_WIDTH_MULT)) @ p["fc3_w"].T + p["fc3_b"]


# ----------------------------------------------------------------------------
if __name__ == "__main__":
    key = jax.random.PRNGKey(0)
    k_x, k_p, k_w3, k_b3 = jax.random.split(key, 4)

    x = jax.random.normal(k_x, (2, 3, 32, 32), jnp.float32)   # NCHW like PyTorch
    params = init_params(k_p)
    # MuReadout is zero-initialized, which would make the logits check vacuous;
    # use nonzero readout weights here so the scaled fc3 path is exercised.
    params["fc3_w"] = 0.1 * jax.random.normal(k_w3, (NUM_CLASSES, FC2_OUT),
                                              jnp.float32)
    params["fc3_b"] = 0.1 * jax.random.normal(k_b3, (NUM_CLASSES,), jnp.float32)

    logits = jax.jit(model_forward)(x, params)
    jax.block_until_ready(logits)

    ref_logits = ref_forward(x, params)
    assert logits.shape == (2, NUM_CLASSES)
    assert jnp.allclose(logits, ref_logits, rtol=1e-3, atol=1e-3), (
        float(jnp.max(jnp.abs(logits - ref_logits))))

    print("KERNEL_OK")
</pallas_src>

<mosaic_0001>
module attributes {stable_mosaic.version = 11 : i64} {
  func.func @_conv_relu_pool_kernel(%arg0: i32, %arg1: memref<4x75x392xf32, #tpu.memory_space<vmem>>, %arg2: memref<6x75xf32, #tpu.memory_space<vmem>>, %arg3: memref<6x1xf32, #tpu.memory_space<vmem>>, %arg4: memref<6x392xf32, #tpu.memory_space<vmem>>) attributes {dimension_semantics = [#tpu.dimension_semantics<parallel>], iteration_bounds = array<i64: 1>, scalar_prefetch = 0 : i64, scratch_operands = 0 : i64, tpu.core_type = #tpu.core_type<tc>, window_params = [{transform_indices = @transform_0, window_bounds = array<i64: 4, 75, 392>}, {pipeline_mode = #tpu.pipeline_mode<synchronous>, transform_indices = @transform_1, window_bounds = array<i64: 6, 75>}, {pipeline_mode = #tpu.pipeline_mode<synchronous>, transform_indices = @transform_2, window_bounds = array<i64: 6, 1>}, {transform_indices = @transform_3, window_bounds = array<i64: 6, 392>}]} {
    %c0 = arith.constant 0 : index
    %c0_0 = arith.constant 0 : index
    %0 = vector.load %arg2[%c0, %c0_0] : memref<6x75xf32, #tpu.memory_space<vmem>>, vector<6x75xf32>
    %c0_1 = arith.constant 0 : index
    %c0_2 = arith.constant 0 : index
    %c0_3 = arith.constant 0 : index
    %1 = vector.load %arg1[%c0_1, %c0_2, %c0_3] : memref<4x75x392xf32, #tpu.memory_space<vmem>>, vector<1x75x392xf32>
    %2 = vector.shape_cast %1 : vector<1x75x392xf32> to vector<75x392xf32>
    %cst = arith.constant dense<0.000000e+00> : vector<6x392xf32>
    %3 = tpu.matmul %0, %2, %cst {dimension_numbers = #tpu.dot_dimension_numbers<[1], [0], [0], [1], [0, 0, 1, 1], [], []>} : vector<6x75xf32>, vector<75x392xf32>, vector<6x392xf32> -> vector<6x392xf32>
    %c1 = arith.constant 1 : index
    %c0_4 = arith.constant 0 : index
    %c0_5 = arith.constant 0 : index
    %4 = vector.load %arg1[%c1, %c0_4, %c0_5] : memref<4x75x392xf32, #tpu.memory_space<vmem>>, vector<1x75x392xf32>
    %5 = vector.shape_cast %4 : vector<1x75x392xf32> to vector<75x392xf32>
    %cst_6 = arith.constant dense<0.000000e+00> : vector<6x392xf32>
    %6 = tpu.matmul %0, %5, %cst_6 {dimension_numbers = #tpu.dot_dimension_numbers<[1], [0], [0], [1], [0, 0, 1, 1], [], []>} : vector<6x75xf32>, vector<75x392xf32>, vector<6x392xf32> -> vector<6x392xf32>
    %7 = arith.maximumf %3, %6 : vector<6x392xf32>
    %c2 = arith.constant 2 : index
    %c0_7 = arith.constant 0 : index
    %c0_8 = arith.constant 0 : index
    %8 = vector.load %arg1[%c2, %c0_7, %c0_8] : memref<4x75x392xf32, #tpu.memory_space<vmem>>, vector<1x75x392xf32>
    %9 = vector.shape_cast %8 : vector<1x75x392xf32> to vector<75x392xf32>
    %cst_9 = arith.constant dense<0.000000e+00> : vector<6x392xf32>
    %10 = tpu.matmul %0, %9, %cst_9 {dimension_numbers = #tpu.dot_dimension_numbers<[1], [0], [0], [1], [0, 0, 1, 1], [], []>} : vector<6x75xf32>, vector<75x392xf32>, vector<6x392xf32> -> vector<6x392xf32>
    %11 = arith.maximumf %7, %10 : vector<6x392xf32>
    %c3 = arith.constant 3 : index
    %c0_10 = arith.constant 0 : index
    %c0_11 = arith.constant 0 : index
    %12 = vector.load %arg1[%c3, %c0_10, %c0_11] : memref<4x75x392xf32, #tpu.memory_space<vmem>>, vector<1x75x392xf32>
    %13 = vector.shape_cast %12 : vector<1x75x392xf32> to vector<75x392xf32>
    %cst_12 = arith.constant dense<0.000000e+00> : vector<6x392xf32>
    %14 = tpu.matmul %0, %13, %cst_12 {dimension_numbers = #tpu.dot_dimension_numbers<[1], [0], [0], [1], [0, 0, 1, 1], [], []>} : vector<6x75xf32>, vector<75x392xf32>, vector<6x392xf32> -> vector<6x392xf32>
    %15 = arith.maximumf %11, %14 : vector<6x392xf32>
    %c0_13 = arith.constant 0 : index
    %c0_14 = arith.constant 0 : index
    %16 = vector.load %arg3[%c0_13, %c0_14] : memref<6x1xf32, #tpu.memory_space<vmem>>, vector<6x1xf32>
    %17 = vector.broadcast %16 : vector<6x1xf32> to vector<6x392xf32>
    %18 = arith.addf %15, %17 : vector<6x392xf32>
    %cst_15 = arith.constant 0.000000e+00 : f32
    %19 = vector.broadcast %cst_15 : f32 to vector<6x392xf32>
    %20 = arith.maximumf %18, %19 : vector<6x392xf32>
    %c0_16 = arith.constant 0 : index
    %c0_17 = arith.constant 0 : index
    %21 = vector.load %arg4[%c0_16, %c0_17] : memref<6x392xf32, #tpu.memory_space<vmem>>, vector<6x392xf32>
    tpu.vector_store %arg4[%c0_16, %c0_17], %20 {strides = array<i32>} : memref<6x392xf32, #tpu.memory_space<vmem>>, vector<6x392xf32>,
    return
  }
  func.func @transform_0(%arg0: i32) -> (i32, i32, i32) {
    %c0_i32 = arith.constant 0 : i32
    %c0_i32_0 = arith.constant 0 : i32
    %c0_i32_1 = arith.constant 0 : i32
    return %c0_i32, %c0_i32_0, %arg0 : i32, i32, i32
  }
  func.func @transform_1(%arg0: i32) -> (i32, i32) {
    %c0_i32 = arith.constant 0 : i32
    %c0_i32_0 = arith.constant 0 : i32
    %c0_i32_1 = arith.constant 0 : i32
    return %c0_i32, %c0_i32_0 : i32, i32
  }
  func.func @transform_2(%arg0: i32) -> (i32, i32) {
    %c0_i32 = arith.constant 0 : i32
    %c0_i32_0 = arith.constant 0 : i32
    %c0_i32_1 = arith.constant 0 : i32
    return %c0_i32, %c0_i32_0 : i32, i32
  }
  func.func @transform_3(%arg0: i32) -> (i32, i32) {
    %c0_i32 = arith.constant 0 : i32
    %c0_i32_0 = arith.constant 0 : i32
    return %c0_i32, %arg0 : i32, i32
  }
}

module attributes {stable_mosaic.version = 11 : i64} {
  func.func @_conv_relu_pool_kernel(%arg0: i32, %arg1: memref<4x150x50xf32, #tpu.memory_space<vmem>>, %arg2: memref<16x150xf32, #tpu.memory_space<vmem>>, %arg3: memref<16x1xf32, #tpu.memory_space<vmem>>, %arg4: memref<16x50xf32, #tpu.memory_space<vmem>>) attributes {dimension_semantics = [#tpu.dimension_semantics<parallel>], iteration_bounds = array<i64: 1>, scalar_prefetch = 0 : i64, scratch_operands = 0 : i64, tpu.core_type = #tpu.core_type<tc>, window_params = [{transform_indices = @transform_0, window_bounds = array<i64: 4, 150, 50>}, {pipeline_mode = #tpu.pipeline_mode<synchronous>, transform_indices = @transform_1, window_bounds = array<i64: 16, 150>}, {pipeline_mode = #tpu.pipeline_mode<synchronous>, transform_indices = @transform_2, window_bounds = array<i64: 16, 1>}, {transform_indices = @transform_3, window_bounds = array<i64: 16, 50>}]} {
    %c0 = arith.constant 0 : index
    %c0_0 = arith.constant 0 : index
    %0 = vector.load %arg2[%c0, %c0_0] : memref<16x150xf32, #tpu.memory_space<vmem>>, vector<16x150xf32>
    %c0_1 = arith.constant 0 : index
    %c0_2 = arith.constant 0 : index
    %c0_3 = arith.constant 0 : index
    %1 = vector.load %arg1[%c0_1, %c0_2, %c0_3] : memref<4x150x50xf32, #tpu.memory_space<vmem>>, vector<1x150x50xf32>
    %2 = vector.shape_cast %1 : vector<1x150x50xf32> to vector<150x50xf32>
    %cst = arith.constant dense<0.000000e+00> : vector<16x50xf32>
    %3 = tpu.matmul %0, %2, %cst {dimension_numbers = #tpu.dot_dimension_numbers<[1], [0], [0], [1], [0, 0, 1, 1], [], []>} : vector<16x150xf32>, vector<150x50xf32>, vector<16x50xf32> -> vector<16x50xf32>
    %c1 = arith.constant 1 : index
    %c0_4 = arith.constant 0 : index
    %c0_5 = arith.constant 0 : index
    %4 = vector.load %arg1[%c1, %c0_4, %c0_5] : memref<4x150x50xf32, #tpu.memory_space<vmem>>, vector<1x150x50xf32>
    %5 = vector.shape_cast %4 : vector<1x150x50xf32> to vector<150x50xf32>
    %cst_6 = arith.constant dense<0.000000e+00> : vector<16x50xf32>
    %6 = tpu.matmul %0, %5, %cst_6 {dimension_numbers = #tpu.dot_dimension_numbers<[1], [0], [0], [1], [0, 0, 1, 1], [], []>} : vector<16x150xf32>, vector<150x50xf32>, vector<16x50xf32> -> vector<16x50xf32>
    %7 = arith.maximumf %3, %6 : vector<16x50xf32>
    %c2 = arith.constant 2 : index
    %c0_7 = arith.constant 0 : index
    %c0_8 = arith.constant 0 : index
    %8 = vector.load %arg1[%c2, %c0_7, %c0_8] : memref<4x150x50xf32, #tpu.memory_space<vmem>>, vector<1x150x50xf32>
    %9 = vector.shape_cast %8 : vector<1x150x50xf32> to vector<150x50xf32>
    %cst_9 = arith.constant dense<0.000000e+00> : vector<16x50xf32>
    %10 = tpu.matmul %0, %9, %cst_9 {dimension_numbers = #tpu.dot_dimension_numbers<[1], [0], [0], [1], [0, 0, 1, 1], [], []>} : vector<16x150xf32>, vector<150x50xf32>, vector<16x50xf32> -> vector<16x50xf32>
    %11 = arith.maximumf %7, %10 : vector<16x50xf32>
    %c3 = arith.constant 3 : index
    %c0_10 = arith.constant 0 : index
    %c0_11 = arith.constant 0 : index
    %12 = vector.load %arg1[%c3, %c0_10, %c0_11] : memref<4x150x50xf32, #tpu.memory_space<vmem>>, vector<1x150x50xf32>
    %13 = vector.shape_cast %12 : vector<1x150x50xf32> to vector<150x50xf32>
    %cst_12 = arith.constant dense<0.000000e+00> : vector<16x50xf32>
    %14 = tpu.matmul %0, %13, %cst_12 {dimension_numbers = #tpu.dot_dimension_numbers<[1], [0], [0], [1], [0, 0, 1, 1], [], []>} : vector<16x150xf32>, vector<150x50xf32>, vector<16x50xf32> -> vector<16x50xf32>
    %15 = arith.maximumf %11, %14 : vector<16x50xf32>
    %c0_13 = arith.constant 0 : index
    %c0_14 = arith.constant 0 : index
    %16 = vector.load %arg3[%c0_13, %c0_14] : memref<16x1xf32, #tpu.memory_space<vmem>>, vector<16x1xf32>
    %17 = vector.broadcast %16 : vector<16x1xf32> to vector<16x50xf32>
    %18 = arith.addf %15, %17 : vector<16x50xf32>
    %cst_15 = arith.constant 0.000000e+00 : f32
    %19 = vector.broadcast %cst_15 : f32 to vector<16x50xf32>
    %20 = arith.maximumf %18, %19 : vector<16x50xf32>
    %c0_16 = arith.constant 0 : index
    %c0_17 = arith.constant 0 : index
    %21 = vector.load %arg4[%c0_16, %c0_17] : memref<16x50xf32, #tpu.memory_space<vmem>>, vector<16x50xf32>
    tpu.vector_store %arg4[%c0_16, %c0_17], %20 {strides = array<i32>} : memref<16x50xf32, #tpu.memory_space<vmem>>, vector<16x50xf32>,
    return
  }
  func.func @transform_0(%arg0: i32) -> (i32, i32, i32) {
    %c0_i32 = arith.constant 0 : i32
    %c0_i32_0 = arith.constant 0 : i32
    %c0_i32_1 = arith.constant 0 : i32
    return %c0_i32, %c0_i32_0, %arg0 : i32, i32, i32
  }
  func.func @transform_1(%arg0: i32) -> (i32, i32) {
    %c0_i32 = arith.constant 0 : i32
    %c0_i32_0 = arith.constant 0 : i32
    %c0_i32_1 = arith.constant 0 : i32
    return %c0_i32, %c0_i32_0 : i32, i32
  }
  func.func @transform_2(%arg0: i32) -> (i32, i32) {
    %c0_i32 = arith.constant 0 : i32
    %c0_i32_0 = arith.constant 0 : i32
    %c0_i32_1 = arith.constant 0 : i32
    return %c0_i32, %c0_i32_0 : i32, i32
  }
  func.func @transform_3(%arg0: i32) -> (i32, i32) {
    %c0_i32 = arith.constant 0 : i32
    %c0_i32_0 = arith.constant 0 : i32
    return %c0_i32, %arg0 : i32, i32
  }
}

module attributes {stable_mosaic.version = 11 : i64} {
  func.func @_mlp_kernel(%arg0: memref<2x400xf32, #tpu.memory_space<vmem>>, %arg1: memref<400x120xf32, #tpu.memory_space<vmem>>, %arg2: memref<1x120xf32, #tpu.memory_space<vmem>>, %arg3: memref<120x60xf32, #tpu.memory_space<vmem>>, %arg4: memref<1x60xf32, #tpu.memory_space<vmem>>, %arg5: memref<60x10xf32, #tpu.memory_space<vmem>>, %arg6: memref<1x10xf32, #tpu.memory_space<vmem>>, %arg7: memref<2x10xf32, #tpu.memory_space<vmem>>) attributes {dimension_semantics = [], scalar_prefetch = 0 : i64, scratch_operands = 0 : i64, tpu.core_type = #tpu.core_type<tc>} {
    %c0 = arith.constant 0 : index
    %c0_0 = arith.constant 0 : index
    %0 = vector.load %arg0[%c0, %c0_0] : memref<2x400xf32, #tpu.memory_space<vmem>>, vector<2x400xf32>
    %c0_1 = arith.constant 0 : index
    %c0_2 = arith.constant 0 : index
    %1 = vector.load %arg1[%c0_1, %c0_2] : memref<400x120xf32, #tpu.memory_space<vmem>>, vector<400x120xf32>
    %cst = arith.constant dense<0.000000e+00> : vector<2x120xf32>
    %2 = tpu.matmul %0, %1, %cst {dimension_numbers = #tpu.dot_dimension_numbers<[1], [0], [0], [1], [0, 0, 1, 1], [], []>} : vector<2x400xf32>, vector<400x120xf32>, vector<2x120xf32> -> vector<2x120xf32>
    %c0_3 = arith.constant 0 : index
    %c0_4 = arith.constant 0 : index
    %3 = vector.load %arg2[%c0_3, %c0_4] : memref<1x120xf32, #tpu.memory_space<vmem>>, vector<1x120xf32>
    %4 = vector.broadcast %3 : vector<1x120xf32> to vector<2x120xf32>
    %5 = arith.addf %2, %4 : vector<2x120xf32>
    %cst_5 = arith.constant 0.000000e+00 : f32
    %6 = vector.broadcast %cst_5 : f32 to vector<2x120xf32>
    %7 = arith.maximumf %5, %6 : vector<2x120xf32>
    %c0_6 = arith.constant 0 : index
    %c0_7 = arith.constant 0 : index
    %8 = vector.load %arg3[%c0_6, %c0_7] : memref<120x60xf32, #tpu.memory_space<vmem>>, vector<120x60xf32>
    %cst_8 = arith.constant dense<0.000000e+00> : vector<2x60xf32>
    %9 = tpu.matmul %7, %8, %cst_8 {dimension_numbers = #tpu.dot_dimension_numbers<[1], [0], [0], [1], [0, 0, 1, 1], [], []>} : vector<2x120xf32>, vector<120x60xf32>, vector<2x60xf32> -> vector<2x60xf32>
    %c0_9 = arith.constant 0 : index
    %c0_10 = arith.constant 0 : index
    %10 = vector.load %arg4[%c0_9, %c0_10] : memref<1x60xf32, #tpu.memory_space<vmem>>, vector<1x60xf32>
    %11 = vector.broadcast %10 : vector<1x60xf32> to vector<2x60xf32>
    %12 = arith.addf %9, %11 : vector<2x60xf32>
    %cst_11 = arith.constant 0.000000e+00 : f32
    %13 = vector.broadcast %cst_11 : f32 to vector<2x60xf32>
    %14 = arith.maximumf %12, %13 : vector<2x60xf32>
    %c0_12 = arith.constant 0 : index
    %c0_13 = arith.constant 0 : index
    %15 = vector.load %arg5[%c0_12, %c0_13] : memref<60x10xf32, #tpu.memory_space<vmem>>, vector<60x10xf32>
    %cst_14 = arith.constant dense<0.000000e+00> : vector<2x10xf32>
    %16 = tpu.matmul %14, %15, %cst_14 {dimension_numbers = #tpu.dot_dimension_numbers<[1], [0], [0], [1], [0, 0, 1, 1], [], []>} : vector<2x60xf32>, vector<60x10xf32>, vector<2x10xf32> -> vector<2x10xf32>
    %c0_15 = arith.constant 0 : index
    %c0_16 = arith.constant 0 : index
    %17 = vector.load %arg6[%c0_15, %c0_16] : memref<1x10xf32, #tpu.memory_space<vmem>>, vector<1x10xf32>
    %18 = vector.broadcast %17 : vector<1x10xf32> to vector<2x10xf32>
    %19 = arith.addf %16, %18 : vector<2x10xf32>
    %c0_17 = arith.constant 0 : index
    %c0_18 = arith.constant 0 : index
    %20 = vector.load %arg7[%c0_17, %c0_18] : memref<2x10xf32, #tpu.memory_space<vmem>>, vector<2x10xf32>
    tpu.vector_store %arg7[%c0_17, %c0_18], %19 {strides = array<i32>} : memref<2x10xf32, #tpu.memory_space<vmem>>, vector<2x10xf32>,
    return
  }
}

</mosaic_0001>

<llo_original>
// kernel: model_forward.3
$region0: #{model_forward.3}
  #allocation0 [shape = 'u32[]', space=smem, size = 0x4, offset = 0x4, fixed_abs, tag = 'smem constant byte address 0x4 - core index']
  #allocation1 [shape = 'u32[72,128]{1,0:T(1,128)}', space=vmem, size = 0x9000, scoped, tag = 'internal scratch']
  %s0 = inlined_call_operand.vmem [shape: f32[4,75,392], index: 0, kind: input, shape index: {}]
  %s1 = inlined_call_operand.vmem [shape: f32[6,75], index: 1, kind: input, shape index: {}]
  %s2 = inlined_call_operand.vmem [shape: f32[6,1], index: 2, kind: input, shape index: {}]
  %s3 = inlined_call_operand.vmem [shape: f32[6,392], index: 3, kind: output, shape index: {}]
  %s4 = sld [smem:[#allocation0]]
  $region22: #{model_forward.3} parent=0
    _
  %s6 = ssub.s32 1, %s4
  %s7 = scalar_select 0, %s6, %s4
  // Predicated region
  $region2: #{model_forward.3} parent=0 // pred_check
    _
  $region3: #{model_forward.3} parent=0 // pred_check_branch
    %9 = sbr.rel (0) target = $region5
  $region4: #{model_forward.3} parent=0 // pred_region
    _
  $region5: #{model_forward.3} parent=0 // pred_fallthru
    _
  // Predicated region
  $region6: #{model_forward.3} parent=0 // pred_check
    _
  $region7: #{model_forward.3} parent=0 // pred_check_branch
    %11 = sbr.rel (0) target = $region9
  $region8: #{model_forward.3} parent=0 // pred_region
    _
  $region9: #{model_forward.3} parent=0 // pred_fallthru
    _
  // Predicated region
  $region10: #{model_forward.3} parent=0 // pred_check
    _
  $region11: #{model_forward.3} parent=0 // pred_check_branch
    %13 = sbr.rel (0) target = $region13
  $region12: #{model_forward.3} parent=0 // pred_region
    _
  $region13: #{model_forward.3} parent=0 // pred_fallthru
    _
  %v14 = vld [vmem:[%s1] sm:$0x3f]
  %v15 = vld [vmem:[%s0] sm:$0xff]
  %v16 = vld [vmem:[%s0 + $0x8] sm:$0xff]
  %v17 = vld [vmem:[%s0 + $0x10] sm:$0xff]
  %v18 = vld [vmem:[%s0 + $0x18] sm:$0xff]
  %v19 = vld [vmem:[%s0 + $0x20] sm:$0xff]
  %v20 = vld [vmem:[%s0 + $0x28] sm:$0xff]
  %v21 = vld [vmem:[%s0 + $0x30] sm:$0xff]
  %v22 = vld [vmem:[%s0 + $0x38] sm:$0xff]
  %v23 = vld [vmem:[%s0 + $0x40] sm:$0xff]
  %v24 = vld [vmem:[%s0 + $0x48] sm:$0xff]
  %v25 = vld [vmem:[%s0 + $0x50] sm:$0xff]
  %v26 = vld [vmem:[%s0 + $0x58] sm:$0xff]
  %v27 = vld [vmem:[%s0 + $0x60] sm:$0xff]
  %v28 = vld [vmem:[%s0 + $0x68] sm:$0xff]
  %v29 = vld [vmem:[%s0 + $0x70] sm:$0xff]
  %v30 = vld [vmem:[%s0 + $0x78] sm:$0xff]
  %v31 = vld [vmem:[%s0 + $0x80] sm:$0xff]
  %v32 = vld [vmem:[%s0 + $0x88] sm:$0xff]
  %v33 = vld [vmem:[%s0 + $0x90] sm:$0xff]
  %v34 = vld [vmem:[%s0 + $0x98] sm:$0xff]
  %v35 = vld [vmem:[%s0 + $0xa0] sm:$0xff]
  %v36 = vld [vmem:[%s0 + $0xa8] sm:$0xff]
  %v37 = vld [vmem:[%s0 + $0xb0] sm:$0xff]
  %v38 = vld [vmem:[%s0 + $0xb8] sm:$0xff]
  %v39 = vld [vmem:[%s0 + $0xc0] sm:$0xff]
  %v40 = vld [vmem:[%s0 + $0xc8] sm:$0xff]
  %v41 = vld [vmem:[%s0 + $0xd0] sm:$0xff]
  %v42 = vld [vmem:[%s0 + $0xd8] sm:$0xff]
  %v43 = vld [vmem:[%s0 + $0xe0] sm:$0xff]
  %v44 = vld [vmem:[%s0 + $0xe8] sm:$0xff]
  %v45 = vld [vmem:[%s0 + $0xf0] sm:$0xff]
  %v46 = vld [vmem:[%s0 + $0xf8] sm:$0xff]
  %v47 = vld [vmem:[%s0 + $0x100] sm:$0xff]
  %v48 = vld [vmem:[%s0 + $0x108] sm:$0xff]
  %v49 = vld [vmem:[%s0 + $0x110] sm:$0xff]
  %v50 = vld [vmem:[%s0 + $0x118] sm:$0xff]
  %v51 = vld [vmem:[%s0 + $0x120] sm:$0x7]
  %v52 = vld [vmem:[%s0 + $0x128] sm:$0x7]
  %v53 = vld [vmem:[%s0 + $0x130] sm:$0x7]
  %v54 = vld [vmem:[%s0 + $0x138] sm:$0x7]
  %vm55 = vcmask 613376
  %v57 = vsel %vm55, %v14, 0
  %vm59 = vcmask 1042432
  %v61 = vsel %vm59, %v51, 0
  %v64 = vsel %vm59, %v52, 0
  %v67 = vsel %vm59, %v53, 0
  %v70 = vsel %vm59, %v54, 0
  %72 = vmatpush.msra.mxu0 0.0
  %73 = vmatpush.msra.mxu0 0.0
  %74 = vmatpush.msra.mxu0 0.0
  %75 = vmatpush.msra.mxu0 0.0
  %76 = vmatpush.msra.mxu0 0.0
  %77 = vmatpush.msra.mxu0 0.0
  %78 = vmatpush.msra.mxu0 %v61
  %79 = vmatpush.msra.mxu0 %v47
  %80 = vmatpush.msra.mxu0 %v43
  %81 = vmatpush.msra.mxu0 %v39
  %82 = vmatpush.msra.mxu0 %v35
  %83 = vmatpush.msra.mxu0 %v31
  %84 = vmatpush.msra.mxu0 %v27
  %85 = vmatpush.msra.mxu0 %v23
  %86 = vmatpush.msra.mxu0 %v19
  %87 = vmatpush.msra.mxu0 %v15
  %88 = vmatmul.f32.gmra.mxu0 %v57
  %v89 = vpop.f32.mrf.mxu0
  %v90 = vadd.f32 0.0, %v89
  %91 = vdwg.mxu0
  %92 = vmatpush.msra.mxu0 0.0
  %93 = vmatpush.msra.mxu0 0.0
  %94 = vmatpush.msra.mxu0 0.0
  %95 = vmatpush.msra.mxu0 0.0
  %96 = vmatpush.msra.mxu0 0.0
  %97 = vmatpush.msra.mxu0 0.0
  %98 = vmatpush.msra.mxu0 %v64
  %99 = vmatpush.msra.mxu0 %v48
  %100 = vmatpush.msra.mxu0 %v44
  %101 = vmatpush.msra.mxu0 %v40
  %102 = vmatpush.msra.mxu0 %v36
  %103 = vmatpush.msra.mxu0 %v32
  %104 = vmatpush.msra.mxu0 %v28
  %105 = vmatpush.msra.mxu0 %v24
  %106 = vmatpush.msra.mxu0 %v20
  %107 = vmatpush.msra.mxu0 %v16
  %108 = vmatmul.f32.gmra.mxu0 %v57
  %v109 = vpop.f32.mrf.mxu0
  %v110 = vadd.f32 0.0, %v109
  %111 = vdwg.mxu0
  %112 = vmatpush.msra.mxu0 0.0
  %113 = vmatpush.msra.mxu0 0.0
  %114 = vmatpush.msra.mxu0 0.0
  %115 = vmatpush.msra.mxu0 0.0
  %116 = vmatpush.msra.mxu0 0.0
  %117 = vmatpush.msra.mxu0 0.0
  %118 = vmatpush.msra.mxu0 %v67
  %119 = vmatpush.msra.mxu0 %v49
  %120 = vmatpush.msra.mxu0 %v45
  %121 = vmatpush.msra.mxu0 %v41
  %122 = vmatpush.msra.mxu0 %v37
  %123 = vmatpush.msra.mxu0 %v33
  %124 = vmatpush.msra.mxu0 %v29
  %125 = vmatpush.msra.mxu0 %v25
  %126 = vmatpush.msra.mxu0 %v21
  %127 = vmatpush.msra.mxu0 %v17
  %128 = vmatmul.f32.gmra.mxu0 %v57
  %v129 = vpop.f32.mrf.mxu0
  %v130 = vadd.f32 0.0, %v129
  %131 = vdwg.mxu0
  %132 = vmatpush.msra.mxu0 0.0
  %133 = vmatpush.msra.mxu0 0.0
  %134 = vmatpush.msra.mxu0 0.0
  %135 = vmatpush.msra.mxu0 0.0
  %136 = vmatpush.msra.mxu0 0.0
  %137 = vmatpush.msra.mxu0 0.0
  %138 = vmatpush.msra.mxu0 %v70
  %139 = vmatpush.msra.mxu0 %v50
  %140 = vmatpush.msra.mxu0 %v46
  %141 = vmatpush.msra.mxu0 %v42
  %142 = vmatpush.msra.mxu0 %v38
  %143 = vmatpush.msra.mxu0 %v34
  %144 = vmatpush.msra.mxu0 %v30
  %145 = vmatpush.msra.mxu0 %v26
  %146 = vmatpush.msra.mxu0 %v22
  %147 = vmatpush.msra.mxu0 %v18
  %148 = vmatmul.f32.gmra.mxu0 %v57
  %v149 = vpop.f32.mrf.mxu0
  %v150 = vadd.f32 0.0, %v149
  %151 = vdwg.mxu0
  %s152 = scalar_lea.vmem %s0, 320
  %v153 = vld [vmem:[%s152] sm:$0xff]
  %v154 = vld [vmem:[%s152 + $0x8] sm:$0xff]
  %v155 = vld [vmem:[%s152 + $0x10] sm:$0xff]
  %v156 = vld [vmem:[%s152 + $0x18] sm:$0xff]
  %v157 = vld [vmem:[%s152 + $0x20] sm:$0xff]
  %v158 = vld [vmem:[%s152 + $0x28] sm:$0xff]
  %v159 = vld [vmem:[%s152 + $0x30] sm:$0xff]
  %v160 = vld [vmem:[%s152 + $0x38] sm:$0xff]
  %v161 = vld [vmem:[%s152 + $0x40] sm:$0xff]
  %v162 = vld [vmem:[%s152 + $0x48] sm:$0xff]
  %v163 = vld [vmem:[%s152 + $0x50] sm:$0xff]
  %v164 = vld [vmem:[%s152 + $0x58] sm:$0xff]
  %v165 = vld [vmem:[%s152 + $0x60] sm:$0xff]
  %v166 = vld [vmem:[%s152 + $0x68] sm:$0xff]
  %v167 = vld [vmem:[%s152 + $0x70] sm:$0xff]
  %v168 = vld [vmem:[%s152 + $0x78] sm:$0xff]
  %v169 = vld [vmem:[%s152 + $0x80] sm:$0xff]
  %v170 = vld [vmem:[%s152 + $0x88] sm:$0xff]
  %v171 = vld [vmem:[%s152 + $0x90] sm:$0xff]
  %v172 = vld [vmem:[%s152 + $0x98] sm:$0xff]
  %v173 = vld [vmem:[%s152 + $0xa0] sm:$0xff]
  %v174 = vld [vmem:[%s152 + $0xa8] sm:$0xff]
  %v175 = vld [vmem:[%s152 + $0xb0] sm:$0xff]
  %v176 = vld [vmem:[%s152 + $0xb8] sm:$0xff]
  %v177 = vld [vmem:[%s152 + $0xc0] sm:$0xff]
  %v178 = vld [vmem:[%s152 + $0xc8] sm:$0xff]
  %v179 = vld [vmem:[%s152 + $0xd0] sm:$0xff]
  %v180 = vld [vmem:[%s152 + $0xd8] sm:$0xff]
  %v181 = vld [vmem:[%s152 + $0xe0] sm:$0xff]
  %v182 = vld [vmem:[%s152 + $0xe8] sm:$0xff]
  %v183 = vld [vmem:[%s152 + $0xf0] sm:$0xff]
  %v184 = vld [vmem:[%s152 + $0xf8] sm:$0xff]
  %v185 = vld [vmem:[%s152 + $0x100] sm:$0xff]
  %v186 = vld [vmem:[%s152 + $0x108] sm:$0xff]
  %v187 = vld [vmem:[%s152 + $0x110] sm:$0xff]
  %v188 = vld [vmem:[%s152 + $0x118] sm:$0xff]
  %v189 = vld [vmem:[%s152 + $0x120] sm:$0x7]
  %v190 = vld [vmem:[%s152 + $0x128] sm:$0x7]
  %v191 = vld [vmem:[%s152 + $0x130] sm:$0x7]
  %v192 = vld [vmem:[%s152 + $0x138] sm:$0x7]
  %v194 = vsel %vm59, %v189, 0
  %v197 = vsel %vm59, %v190, 0
  %v200 = vsel %vm59, %v191, 0
  %v203 = vsel %vm59, %v192, 0
  %205 = vmatpush.msra.mxu0 0.0
  %206 = vmatpush.msra.mxu0 0.0
  %207 = vmatpush.msra.mxu0 0.0
  %208 = vmatpush.msra.mxu0 0.0
  %209 = vmatpush.msra.mxu0 0.0
  %210 = vmatpush.msra.mxu0 0.0
  %211 = vmatpush.msra.mxu0 %v194
  %212 = vmatpush.msra.mxu0 %v185
  %213 = vmatpush.msra.mxu0 %v181
  %214 = vmatpush.msra.mxu0 %v177
  %215 = vmatpush.msra.mxu0 %v173
  %216 = vmatpush.msra.mxu0 %v169
  %217 = vmatpush.msra.mxu0 %v165
  %218 = vmatpush.msra.mxu0 %v161
  %219 = vmatpush.msra.mxu0 %v157
  %220 = vmatpush.msra.mxu0 %v153
  %221 = vmatmul.f32.gmra.mxu0 %v57
  %v222 = vpop.f32.mrf.mxu0
  %v223 = vadd.f32 0.0, %v222
  %224 = vdwg.mxu0
  %225 = vmatpush.msra.mxu0 0.0
  %226 = vmatpush.msra.mxu0 0.0
  %227 = vmatpush.msra.mxu0 0.0
  %228 = vmatpush.msra.mxu0 0.0
  %229 = vmatpush.msra.mxu0 0.0
  %230 = vmatpush.msra.mxu0 0.0
  %231 = vmatpush.msra.mxu0 %v197
  %232 = vmatpush.msra.mxu0 %v186
  %233 = vmatpush.msra.mxu0 %v182
  %234 = vmatpush.msra.mxu0 %v178
  %235 = vmatpush.msra.mxu0 %v174
  %236 = vmatpush.msra.mxu0 %v170
  %237 = vmatpush.msra.mxu0 %v166
  %238 = vmatpush.msra.mxu0 %v162
  %239 = vmatpush.msra.mxu0 %v158
  %240 = vmatpush.msra.mxu0 %v154
  %241 = vmatmul.f32.gmra.mxu0 %v57
  %v242 = vpop.f32.mrf.mxu0
  %v243 = vadd.f32 0.0, %v242
  %244 = vdwg.mxu0
  %245 = vmatpush.msra.mxu0 0.0
  %246 = vmatpush.msra.mxu0 0.0
  %247 = vmatpush.msra.mxu0 0.0
  %248 = vmatpush.msra.mxu0 0.0
  %249 = vmatpush.msra.mxu0 0.0
  %250 = vmatpush.msra.mxu0 0.0
  %251 = vmatpush.msra.mxu0 %v200
  %252 = vmatpush.msra.mxu0 %v187
  %253 = vmatpush.msra.mxu0 %v183
  %254 = vmatpush.msra.mxu0 %v179
  %255 = vmatpush.msra.mxu0 %v175
  %256 = vmatpush.msra.mxu0 %v171
  %257 = vmatpush.msra.mxu0 %v167
  %258 = vmatpush.msra.mxu0 %v163
  %259 = vmatpush.msra.mxu0 %v159
  %260 = vmatpush.msra.mxu0 %v155
  %261 = vmatmul.f32.gmra.mxu0 %v57
  %v262 = vpop.f32.mrf.mxu0
  %v263 = vadd.f32 0.0, %v262
  %264 = vdwg.mxu0
  %265 = vmatpush.msra.mxu0 0.0
  %266 = vmatpush.msra.mxu0 0.0
  %267 = vmatpush.msra.mxu0 0.0
  %268 = vmatpush.msra.mxu0 0.0
  %269 = vmatpush.msra.mxu0 0.0
  %270 = vmatpush.msra.mxu0 0.0
  %271 = vmatpush.msra.mxu0 %v203
  %272 = vmatpush.msra.mxu0 %v188
  %273 = vmatpush.msra.mxu0 %v184
  %274 = vmatpush.msra.mxu0 %v180
  %275 = vmatpush.msra.mxu0 %v176
  %276 = vmatpush.msra.mxu0 %v172
  %277 = vmatpush.msra.mxu0 %v168
  %278 = vmatpush.msra.mxu0 %v164
  %279 = vmatpush.msra.mxu0 %v160
  %280 = vmatpush.msra.mxu0 %v156
  %281 = vmatmul.f32.gmra.mxu0 %v57
  %v282 = vpop.f32.mrf.mxu0
  %v283 = vadd.f32 0.0, %v282
  %284 = vdwg.mxu0
  %v285 = vmax.f32 %v90, %v223
  %v286 = vmax.f32 %v110, %v243
  %v287 = vmax.f32 %v130, %v263
  %v288 = vmax.f32 %v150, %v283
  %s289 = scalar_lea.vmem %s0, 640
  %v290 = vld [vmem:[%s289] sm:$0xff]
  %v291 = vld [vmem:[%s289 + $0x8] sm:$0xff]
  %v292 = vld [vmem:[%s289 + $0x10] sm:$0xff]
  %v293 = vld [vmem:[%s289 + $0x18] sm:$0xff]
  %v294 = vld [vmem:[%s289 + $0x20] sm:$0xff]
  %v295 = vld [vmem:[%s289 + $0x28] sm:$0xff]
  %v296 = vld [vmem:[%s289 + $0x30] sm:$0xff]
  %v297 = vld [vmem:[%s289 + $0x38] sm:$0xff]
  %v298 = vld [vmem:[%s289 + $0x40] sm:$0xff]
  %v299 = vld [vmem:[%s289 + $0x48] sm:$0xff]
  %v300 = vld [vmem:[%s289 + $0x50] sm:$0xff]
  %v301 = vld [vmem:[%s289 + $0x58] sm:$0xff]
  %v302 = vld [vmem:[%s289 + $0x60] sm:$0xff]
  %v303 = vld [vmem:[%s289 + $0x68] sm:$0xff]
  %v304 = vld [vmem:[%s289 + $0x70] sm:$0xff]
  %v305 = vld [vmem:[%s289 + $0x78] sm:$0xff]
  %v306 = vld [vmem:[%s289 + $0x80] sm:$0xff]
  %v307 = vld [vmem:[%s289 + $0x88] sm:$0xff]
  %v308 = vld [vmem:[%s289 + $0x90] sm:$0xff]
  %v309 = vld [vmem:[%s289 + $0x98] sm:$0xff]
  %v310 = vld [vmem:[%s289 + $0xa0] sm:$0xff]
  %v311 = vld [vmem:[%s289 + $0xa8] sm:$0xff]
  %v312 = vld [vmem:[%s289 + $0xb0] sm:$0xff]
  %v313 = vld [vmem:[%s289 + $0xb8] sm:$0xff]
  %v314 = vld [vmem:[%s289 + $0xc0] sm:$0xff]
  %v315 = vld [vmem:[%s289 + $0xc8] sm:$0xff]
  %v316 = vld [vmem:[%s289 + $0xd0] sm:$0xff]
  %v317 = vld [vmem:[%s289 + $0xd8] sm:$0xff]
  %v318 = vld [vmem:[%s289 + $0xe0] sm:$0xff]
  %v319 = vld [vmem:[%s289 + $0xe8] sm:$0xff]
  %v320 = vld [vmem:[%s289 + $0xf0] sm:$0xff]
  %v321 = vld [vmem:[%s289 + $0xf8] sm:$0xff]
  %v322 = vld [vmem:[%s289 + $0x100] sm:$0xff]
  %v323 = vld [vmem:[%s289 + $0x108] sm:$0xff]
  %v324 = vld [vmem:[%s289 + $0x110] sm:$0xff]
  %v325 = vld [vmem:[%s289 + $0x118] sm:$0xff]
  %v326 = vld [vmem:[%s289 + $0x120] sm:$0x7]
  %v327 = vld [vmem:[%s289 + $0x128] sm:$0x7]
  %v328 = vld [vmem:[%s289 + $0x130] sm:$0x7]
  %v329 = vld [vmem:[%s289 + $0x138] sm:$0x7]
  %v331 = vsel %vm59, %v326, 0
  %v334 = vsel %vm59, %v327, 0
  %v337 = vsel %vm59, %v328, 0
  %v340 = vsel %vm59, %v329, 0
  %342 = vmatpush.msra.mxu0 0.0
  %343 = vmatpush.msra.mxu0 0.0
  %344 = vmatpush.msra.mxu0 0.0
  %345 = vmatpush.msra.mxu0 0.0
  %346 = vmatpush.msra.mxu0 0.0
  %347 = vmatpush.msra.mxu0 0.0
  %348 = vmatpush.msra.mxu0 %v331
  %349 = vmatpush.msra.mxu0 %v322
  %350 = vmatpush.msra.mxu0 %v318
  %351 = vmatpush.msra.mxu0 %v314
  %352 = vmatpush.msra.mxu0 %v310
  %353 = vmatpush.msra.mxu0 %v306
  %354 = vmatpush.msra.mxu0 %v302
  %355 = vmatpush.msra.mxu0 %v298
  %356 = vmatpush.msra.mxu0 %v294
  %357 = vmatpush.msra.mxu0 %v290
  %358 = vmatmul.f32.gmra.mxu0 %v57
  %v359 = vpop.f32.mrf.mxu0
  %v360 = vadd.f32 0.0, %v359
  %361 = vdwg.mxu0
  %362 = vmatpush.msra.mxu0 0.0
  %363 = vmatpush.msra.mxu0 0.0
  %364 = vmatpush.msra.mxu0 0.0
  %365 = vmatpush.msra.mxu0 0.0
  %366 = vmatpush.msra.mxu0 0.0
  %367 = vmatpush.msra.mxu0 0.0
  %368 = vmatpush.msra.mxu0 %v334
  %369 = vmatpush.msra.mxu0 %v323
  %370 = vmatpush.msra.mxu0 %v319
  %371 = vmatpush.msra.mxu0 %v315
  %372 = vmatpush.msra.mxu0 %v311
  %373 = vmatpush.msra.mxu0 %v307
  %374 = vmatpush.msra.mxu0 %v303
  %375 = vmatpush.msra.mxu0 %v299
  %376 = vmatpush.msra.mxu0 %v295
  %377 = vmatpush.msra.mxu0 %v291
  %378 = vmatmul.f32.gmra.mxu0 %v57
  %v379 = vpop.f32.mrf.mxu0
  %v380 = vadd.f32 0.0, %v379
  %381 = vdwg.mxu0
  %382 = vmatpush.msra.mxu0 0.0
  %383 = vmatpush.msra.mxu0 0.0
  %384 = vmatpush.msra.mxu0 0.0
  %385 = vmatpush.msra.mxu0 0.0
  %386 = vmatpush.msra.mxu0 0.0
  %387 = vmatpush.msra.mxu0 0.0
  %388 = vmatpush.msra.mxu0 %v337
  %389 = vmatpush.msra.mxu0 %v324
  %390 = vmatpush.msra.mxu0 %v320
  %391 = vmatpush.msra.mxu0 %v316
  %392 = vmatpush.msra.mxu0 %v312
  %393 = vmatpush.msra.mxu0 %v308
  %394 = vmatpush.msra.mxu0 %v304
  %395 = vmatpush.msra.mxu0 %v300
  %396 = vmatpush.msra.mxu0 %v296
  %397 = vmatpush.msra.mxu0 %v292
  %398 = vmatmul.f32.gmra.mxu0 %v57
  %v399 = vpop.f32.mrf.mxu0
  %v400 = vadd.f32 0.0, %v399
  %401 = vdwg.mxu0
  %402 = vmatpush.msra.mxu0 0.0
  %403 = vmatpush.msra.mxu0 0.0
  %404 = vmatpush.msra.mxu0 0.0
  %405 = vmatpush.msra.mxu0 0.0
  %406 = vmatpush.msra.mxu0 0.0
  %407 = vmatpush.msra.mxu0 0.0
  %408 = vmatpush.msra.mxu0 %v340
  %409 = vmatpush.msra.mxu0 %v325
  %410 = vmatpush.msra.mxu0 %v321
  %411 = vmatpush.msra.mxu0 %v317
  %412 = vmatpush.msra.mxu0 %v313
  %413 = vmatpush.msra.mxu0 %v309
  %414 = vmatpush.msra.mxu0 %v305
  %415 = vmatpush.msra.mxu0 %v301
  %416 = vmatpush.msra.mxu0 %v297
  %417 = vmatpush.msra.mxu0 %v293
  %418 = vmatmul.f32.gmra.mxu0 %v57
  %v419 = vpop.f32.mrf.mxu0
  %v420 = vadd.f32 0.0, %v419
  %421 = vdwg.mxu0
  %v422 = vmax.f32 %v285, %v360
  %v423 = vmax.f32 %v286, %v380
  %v424 = vmax.f32 %v287, %v400
  %v425 = vmax.f32 %v288, %v420
  %s426 = scalar_lea.vmem %s0, 960
  %v427 = vld [vmem:[%s426] sm:$0xff]
  %v428 = vld [vmem:[%s426 + $0x8] sm:$0xff]
  %v429 = vld [vmem:[%s426 + $0x10] sm:$0xff]
  %v430 = vld [vmem:[%s426 + $0x18] sm:$0xff]
  %v431 = vld [vmem:[%s426 + $0x20] sm:$0xff]
  %v432 = vld [vmem:[%s426 + $0x28] sm:$0xff]
  %v433 = vld [vmem:[%s426 + $0x30] sm:$0xff]
  %v434 = vld [vmem:[%s426 + $0x38] sm:$0xff]
  %v435 = vld [vmem:[%s426 + $0x40] sm:$0xff]
  %v436 = vld [vmem:[%s426 + $0x48] sm:$0xff]
  %v437 = vld [vmem:[%s426 + $0x50] sm:$0xff]
  %v438 = vld [vmem:[%s426 + $0x58] sm:$0xff]
  %v439 = vld [vmem:[%s426 + $0x60] sm:$0xff]
  %v440 = vld [vmem:[%s426 + $0x68] sm:$0xff]
  %v441 = vld [vmem:[%s426 + $0x70] sm:$0xff]
  %v442 = vld [vmem:[%s426 + $0x78] sm:$0xff]
  %v443 = vld [vmem:[%s426 + $0x80] sm:$0xff]
  %v444 = vld [vmem:[%s426 + $0x88] sm:$0xff]
  %v445 = vld [vmem:[%s426 + $0x90] sm:$0xff]
  %v446 = vld [vmem:[%s426 + $0x98] sm:$0xff]
  %v447 = vld [vmem:[%s426 + $0xa0] sm:$0xff]
  %v448 = vld [vmem:[%s426 + $0xa8] sm:$0xff]
  %v449 = vld [vmem:[%s426 + $0xb0] sm:$0xff]
  %v450 = vld [vmem:[%s426 + $0xb8] sm:$0xff]
  %v451 = vld [vmem:[%s426 + $0xc0] sm:$0xff]
  %v452 = vld [vmem:[%s426 + $0xc8] sm:$0xff]
  %v453 = vld [vmem:[%s426 + $0xd0] sm:$0xff]
  %v454 = vld [vmem:[%s426 + $0xd8] sm:$0xff]
  %v455 = vld [vmem:[%s426 + $0xe0] sm:$0xff]
  %v456 = vld [vmem:[%s426 + $0xe8] sm:$0xff]
  %v457 = vld [vmem:[%s426 + $0xf0] sm:$0xff]
  %v458 = vld [vmem:[%s426 + $0xf8] sm:$0xff]
  %v459 = vld [vmem:[%s426 + $0x100] sm:$0xff]
  %v460 = vld [vmem:[%s426 + $0x108] sm:$0xff]
  %v461 = vld [vmem:[%s426 + $0x110] sm:$0xff]
  %v462 = vld [vmem:[%s426 + $0x118] sm:$0xff]
  %v463 = vld [vmem:[%s426 + $0x120] sm:$0x7]
  %v464 = vld [vmem:[%s426 + $0x128] sm:$0x7]
  %v465 = vld [vmem:[%s426 + $0x130] sm:$0x7]
  %v466 = vld [vmem:[%s426 + $0x138] sm:$0x7]
  %v468 = vsel %vm59, %v463, 0
  %v471 = vsel %vm59, %v464, 0
  %v474 = vsel %vm59, %v465, 0
  %v477 = vsel %vm59, %v466, 0
  %479 = vmatpush.msra.mxu0 0.0
  %480 = vmatpush.msra.mxu0 0.0
  %481 = vmatpush.msra.mxu0 0.0
  %482 = vmatpush.msra.mxu0 0.0
  %483 = vmatpush.msra.mxu0 0.0
  %484 = vmatpush.msra.mxu0 0.0
  %485 = vmatpush.msra.mxu0 %v468
  %486 = vmatpush.msra.mxu0 %v459
  %487 = vmatpush.msra.mxu0 %v455
  %488 = vmatpush.msra.mxu0 %v451
  %489 = vmatpush.msra.mxu0 %v447
  %490 = vmatpush.msra.mxu0 %v443
  %491 = vmatpush.msra.mxu0 %v439
  %492 = vmatpush.msra.mxu0 %v435
  %493 = vmatpush.msra.mxu0 %v431
  %494 = vmatpush.msra.mxu0 %v427
  %495 = vmatmul.f32.gmra.mxu0 %v57
  %v496 = vpop.f32.mrf.mxu0
  %v497 = vadd.f32 0.0, %v496
  %498 = vdwg.mxu0
  %499 = vmatpush.msra.mxu0 0.0
  %500 = vmatpush.msra.mxu0 0.0
  %501 = vmatpush.msra.mxu0 0.0
  %502 = vmatpush.msra.mxu0 0.0
  %503 = vmatpush.msra.mxu0 0.0
  %504 = vmatpush.msra.mxu0 0.0
  %505 = vmatpush.msra.mxu0 %v471
  %506 = vmatpush.msra.mxu0 %v460
  %507 = vmatpush.msra.mxu0 %v456
  %508 = vmatpush.msra.mxu0 %v452
  %509 = vmatpush.msra.mxu0 %v448
  %510 = vmatpush.msra.mxu0 %v444
  %511 = vmatpush.msra.mxu0 %v440
  %512 = vmatpush.msra.mxu0 %v436
  %513 = vmatpush.msra.mxu0 %v432
  %514 = vmatpush.msra.mxu0 %v428
  %515 = vmatmul.f32.gmra.mxu0 %v57
  %v516 = vpop.f32.mrf.mxu0
  %v517 = vadd.f32 0.0, %v516
  %518 = vdwg.mxu0
  %519 = vmatpush.msra.mxu0 0.0
  %520 = vmatpush.msra.mxu0 0.0
  %521 = vmatpush.msra.mxu0 0.0
  %522 = vmatpush.msra.mxu0 0.0
  %523 = vmatpush.msra.mxu0 0.0
  %524 = vmatpush.msra.mxu0 0.0
  %525 = vmatpush.msra.mxu0 %v474
  %526 = vmatpush.msra.mxu0 %v461
  %527 = vmatpush.msra.mxu0 %v457
  %528 = vmatpush.msra.mxu0 %v453
  %529 = vmatpush.msra.mxu0 %v449
  %530 = vmatpush.msra.mxu0 %v445
  %531 = vmatpush.msra.mxu0 %v441
  %532 = vmatpush.msra.mxu0 %v437
  %533 = vmatpush.msra.mxu0 %v433
  %534 = vmatpush.msra.mxu0 %v429
  %535 = vmatmul.f32.gmra.mxu0 %v57
  %v536 = vpop.f32.mrf.mxu0
  %v537 = vadd.f32 0.0, %v536
  %538 = vdwg.mxu0
  %539 = vmatpush.msra.mxu0 0.0
  %540 = vmatpush.msra.mxu0 0.0
  %541 = vmatpush.msra.mxu0 0.0
  %542 = vmatpush.msra.mxu0 0.0
  %543 = vmatpush.msra.mxu0 0.0
  %544 = vmatpush.msra.mxu0 0.0
  %545 = vmatpush.msra.mxu0 %v477
  %546 = vmatpush.msra.mxu0 %v462
  %547 = vmatpush.msra.mxu0 %v458
  %548 = vmatpush.msra.mxu0 %v454
  %549 = vmatpush.msra.mxu0 %v450
  %550 = vmatpush.msra.mxu0 %v446
  %551 = vmatpush.msra.mxu0 %v442
  %552 = vmatpush.msra.mxu0 %v438
  %553 = vmatpush.msra.mxu0 %v434
  %554 = vmatpush.msra.mxu0 %v430
  %555 = vmatmul.f32.gmra.mxu0 %v57
  %v556 = vpop.f32.mrf.mxu0
  %v557 = vadd.f32 0.0, %v556
  %558 = vdwg.mxu0
  %v559 = vmax.f32 %v422, %v497
  %v560 = vmax.f32 %v423, %v517
  %v561 = vmax.f32 %v424, %v537
  %v562 = vmax.f32 %v425, %v557
  %v563 = vld [vmem:[%s2] sm:$0x3f]
  %565 = vset.pattern.permute.xlu0 0
  %566 = vperm.xlu0 %565, %v563
  %v567 = vpop.permute.xlu0 %566
  %v569 = vadd.f32 %v559, %v567
  %v570 = vadd.f32 %v560, %v567
  %v571 = vadd.f32 %v561, %v567
  %v572 = vadd.f32 %v562, %v567
  %v573 = vmax.f32 %v569, 0.0
  %v574 = vmax.f32 %v570, 0.0
  %v575 = vmax.f32 %v571, 0.0
  %v576 = vmax.f32 %v572, 0.0
  %577 = vst [vmem:[%s3] sm:$0x3f] %v573
  %578 = vst [vmem:[%s3 + $0x8] sm:$0x3f] %v574
  %579 = vst [vmem:[%s3 + $0x10] sm:$0x3f] %v575
  %vm580 = vcmask 62464
  %581 = vst.msk [vmem:[%s3 + $0x18] sm:$0x3f] %vm580, %v576
  // Predicated region
  $region14: #{model_forward.3} parent=0 // pred_check
    _
  $region15: #{model_forward.3} parent=0 // pred_check_branch
    %583 = sbr.rel (0) target = $region17
  $region16: #{model_forward.3} parent=0 // pred_region
    _
  $region17: #{model_forward.3} parent=0 // pred_fallthru
    _
  // Predicated region
  $region18: #{model_forward.3} parent=0 // pred_check
    _
  $region19: #{model_forward.3} parent=0 // pred_check_branch
    %585 = sbr.rel (0) target = $region21
  $region20: #{model_forward.3} parent=0 // pred_region
    _
  $region21: #{model_forward.3} parent=0 // pred_fallthru
    _

// kernel: model_forward.4
$region0: #{model_forward.4}
  #allocation0 [shape = 'u32[]', space=smem, size = 0x4, offset = 0x4, fixed_abs, tag = 'smem constant byte address 0x4 - core index']
  #allocation1 [shape = 'u32[72,128]{1,0:T(1,128)}', space=vmem, size = 0x9000, scoped, tag = 'internal scratch']
  %s0 = inlined_call_operand.vmem [shape: f32[4,150,50], index: 0, kind: input, shape index: {}]
  %s1 = inlined_call_operand.vmem [shape: f32[16,150], index: 1, kind: input, shape index: {}]
  %s2 = inlined_call_operand.vmem [shape: f32[16,1], index: 2, kind: input, shape index: {}]
  %s3 = inlined_call_operand.vmem [shape: f32[16,50], index: 3, kind: output, shape index: {}]
  %s4 = sld [smem:[#allocation0]]
  $region22: #{model_forward.4} parent=0
    _
  %s6 = ssub.s32 1, %s4
  %s7 = scalar_select 0, %s6, %s4
  // Predicated region
  $region2: #{model_forward.4} parent=0 // pred_check
    _
  $region3: #{model_forward.4} parent=0 // pred_check_branch
    %9 = sbr.rel (0) target = $region5
  $region4: #{model_forward.4} parent=0 // pred_region
    _
  $region5: #{model_forward.4} parent=0 // pred_fallthru
    _
  // Predicated region
  $region6: #{model_forward.4} parent=0 // pred_check
    _
  $region7: #{model_forward.4} parent=0 // pred_check_branch
    %11 = sbr.rel (0) target = $region9
  $region8: #{model_forward.4} parent=0 // pred_region
    _
  $region9: #{model_forward.4} parent=0 // pred_fallthru
    _
  // Predicated region
  $region10: #{model_forward.4} parent=0 // pred_check
    _
  $region11: #{model_forward.4} parent=0 // pred_check_branch
    %13 = sbr.rel (0) target = $region13
  $region12: #{model_forward.4} parent=0 // pred_region
    _
  $region13: #{model_forward.4} parent=0 // pred_fallthru
    _
  %v14 = vld [vmem:[%s1] sm:$0xff]
  %v15 = vld [vmem:[%s1 + $0x8] sm:$0xff]
  %v16 = vld [vmem:[%s1 + $0x10] sm:$0xff]
  %v17 = vld [vmem:[%s1 + $0x18] sm:$0xff]
  %v18 = vld [vmem:[%s0] sm:$0xff]
  %v19 = vld [vmem:[%s0 + $0x8] sm:$0xff]
  %v20 = vld [vmem:[%s0 + $0x10] sm:$0xff]
  %v21 = vld [vmem:[%s0 + $0x18] sm:$0xff]
  %v22 = vld [vmem:[%s0 + $0x20] sm:$0xff]
  %v23 = vld [vmem:[%s0 + $0x28] sm:$0xff]
  %v24 = vld [vmem:[%s0 + $0x30] sm:$0xff]
  %v25 = vld [vmem:[%s0 + $0x38] sm:$0xff]
  %v26 = vld [vmem:[%s0 + $0x40] sm:$0xff]
  %v27 = vld [vmem:[%s0 + $0x48] sm:$0xff]
  %v28 = vld [vmem:[%s0 + $0x50] sm:$0xff]
  %v29 = vld [vmem:[%s0 + $0x58] sm:$0xff]
  %v30 = vld [vmem:[%s0 + $0x60] sm:$0xff]
  %v31 = vld [vmem:[%s0 + $0x68] sm:$0xff]
  %v32 = vld [vmem:[%s0 + $0x70] sm:$0xff]
  %v33 = vld [vmem:[%s0 + $0x78] sm:$0xff]
  %v34 = vld [vmem:[%s0 + $0x80] sm:$0xff]
  %v35 = vld [vmem:[%s0 + $0x88] sm:$0xff]
  %v36 = vld [vmem:[%s0 + $0x90] sm:$0x3f]
  %vm37 = vcmask 179200
  %v39 = vsel %vm37, %v15, 0
  %v42 = vsel %vm37, %v17, 0
  %vm44 = vcmask 1045504
  %v46 = vsel %vm44, %v36, 0
  %48 = vmatpush.msra.mxu0 %v33
  %49 = vmatpush.msra.mxu0 %v32
  %50 = vmatpush.msra.mxu0 %v31
  %51 = vmatpush.msra.mxu0 %v30
  %52 = vmatpush.msra.mxu0 %v29
  %53 = vmatpush.msra.mxu0 %v28
  %54 = vmatpush.msra.mxu0 %v27
  %55 = vmatpush.msra.mxu0 %v26
  %56 = vmatpush.msra.mxu0 %v25
  %57 = vmatpush.msra.mxu0 %v24
  %58 = vmatpush.msra.mxu0 %v23
  %59 = vmatpush.msra.mxu0 %v22
  %60 = vmatpush.msra.mxu0 %v21
  %61 = vmatpush.msra.mxu0 %v20
  %62 = vmatpush.msra.mxu0 %v19
  %63 = vmatpush.msra.mxu0 %v18
  %64 = vmatmul.f32.gmra.mxu0 %v14
  %v65 = vpop.f32.mrf.mxu0
  %v66 = vadd.f32 0.0, %v65
  %67 = vmatmul.f32.gmra.mxu0 %v16
  %v68 = vpop.f32.mrf.mxu0
  %v69 = vadd.f32 0.0, %v68
  %70 = vdwg.mxu0
  %71 = vmatpush.msra.mxu0 0.0
  %72 = vmatpush.msra.mxu0 0.0
  %73 = vmatpush.msra.mxu0 0.0
  %74 = vmatpush.msra.mxu0 0.0
  %75 = vmatpush.msra.mxu0 0.0
  %76 = vmatpush.msra.mxu0 0.0
  %77 = vmatpush.msra.mxu0 0.0
  %78 = vmatpush.msra.mxu0 0.0
  %79 = vmatpush.msra.mxu0 0.0
  %80 = vmatpush.msra.mxu0 0.0
  %81 = vmatpush.msra.mxu0 0.0
  %82 = vmatpush.msra.mxu0 0.0
  %83 = vmatpush.msra.mxu0 0.0
  %84 = vmatpush.msra.mxu0 %v46
  %85 = vmatpush.msra.mxu0 %v35
  %86 = vmatpush.msra.mxu0 %v34
  %87 = vmatmul.f32.gmra.mxu0 %v39
  %v88 = vpop.f32.mrf.mxu0
  %v89 = vadd.f32 %v66, %v88
  %90 = vmatmul.f32.gmra.mxu0 %v42
  %v91 = vpop.f32.mrf.mxu0
  %v92 = vadd.f32 %v69, %v91
  %93 = vdwg.mxu0
  %s94 = scalar_lea.vmem %s0, 152
  %v95 = vld [vmem:[%s94] sm:$0xff]
  %v96 = vld [vmem:[%s94 + $0x8] sm:$0xff]
  %v97 = vld [vmem:[%s94 + $0x10] sm:$0xff]
  %v98 = vld [vmem:[%s94 + $0x18] sm:$0xff]
  %v99 = vld [vmem:[%s94 + $0x20] sm:$0xff]
  %v100 = vld [vmem:[%s94 + $0x28] sm:$0xff]
  %v101 = vld [vmem:[%s94 + $0x30] sm:$0xff]
  %v102 = vld [vmem:[%s94 + $0x38] sm:$0xff]
  %v103 = vld [vmem:[%s94 + $0x40] sm:$0xff]
  %v104 = vld [vmem:[%s94 + $0x48] sm:$0xff]
  %v105 = vld [vmem:[%s94 + $0x50] sm:$0xff]
  %v106 = vld [vmem:[%s94 + $0x58] sm:$0xff]
  %v107 = vld [vmem:[%s94 + $0x60] sm:$0xff]
  %v108 = vld [vmem:[%s94 + $0x68] sm:$0xff]
  %v109 = vld [vmem:[%s94 + $0x70] sm:$0xff]
  %v110 = vld [vmem:[%s94 + $0x78] sm:$0xff]
  %v111 = vld [vmem:[%s94 + $0x80] sm:$0xff]
  %v112 = vld [vmem:[%s94 + $0x88] sm:$0xff]
  %v113 = vld [vmem:[%s94 + $0x90] sm:$0x3f]
  %v115 = vsel %vm44, %v113, 0
  %117 = vmatpush.msra.mxu0 %v110
  %118 = vmatpush.msra.mxu0 %v109
  %119 = vmatpush.msra.mxu0 %v108
  %120 = vmatpush.msra.mxu0 %v107
  %121 = vmatpush.msra.mxu0 %v106
  %122 = vmatpush.msra.mxu0 %v105
  %123 = vmatpush.msra.mxu0 %v104
  %124 = vmatpush.msra.mxu0 %v103
  %125 = vmatpush.msra.mxu0 %v102
  %126 = vmatpush.msra.mxu0 %v101
  %127 = vmatpush.msra.mxu0 %v100
  %128 = vmatpush.msra.mxu0 %v99
  %129 = vmatpush.msra.mxu0 %v98
  %130 = vmatpush.msra.mxu0 %v97
  %131 = vmatpush.msra.mxu0 %v96
  %132 = vmatpush.msra.mxu0 %v95
  %133 = vmatmul.f32.gmra.mxu0 %v14
  %v134 = vpop.f32.mrf.mxu0
  %v135 = vadd.f32 0.0, %v134
  %136 = vmatmul.f32.gmra.mxu0 %v16
  %v137 = vpop.f32.mrf.mxu0
  %v138 = vadd.f32 0.0, %v137
  %139 = vdwg.mxu0
  %140 = vmatpush.msra.mxu0 0.0
  %141 = vmatpush.msra.mxu0 0.0
  %142 = vmatpush.msra.mxu0 0.0
  %143 = vmatpush.msra.mxu0 0.0
  %144 = vmatpush.msra.mxu0 0.0
  %145 = vmatpush.msra.mxu0 0.0
  %146 = vmatpush.msra.mxu0 0.0
  %147 = vmatpush.msra.mxu0 0.0
  %148 = vmatpush.msra.mxu0 0.0
  %149 = vmatpush.msra.mxu0 0.0
  %150 = vmatpush.msra.mxu0 0.0
  %151 = vmatpush.msra.mxu0 0.0
  %152 = vmatpush.msra.mxu0 0.0
  %153 = vmatpush.msra.mxu0 %v115
  %154 = vmatpush.msra.mxu0 %v112
  %155 = vmatpush.msra.mxu0 %v111
  %156 = vmatmul.f32.gmra.mxu0 %v39
  %v157 = vpop.f32.mrf.mxu0
  %v158 = vadd.f32 %v135, %v157
  %159 = vmatmul.f32.gmra.mxu0 %v42
  %v160 = vpop.f32.mrf.mxu0
  %v161 = vadd.f32 %v138, %v160
  %162 = vdwg.mxu0
  %v163 = vmax.f32 %v89, %v158
  %v164 = vmax.f32 %v92, %v161
  %s165 = scalar_lea.vmem %s0, 304
  %v166 = vld [vmem:[%s165] sm:$0xff]
  %v167 = vld [vmem:[%s165 + $0x8] sm:$0xff]
  %v168 = vld [vmem:[%s165 + $0x10] sm:$0xff]
  %v169 = vld [vmem:[%s165 + $0x18] sm:$0xff]
  %v170 = vld [vmem:[%s165 + $0x20] sm:$0xff]
  %v171 = vld [vmem:[%s165 + $0x28] sm:$0xff]
  %v172 = vld [vmem:[%s165 + $0x30] sm:$0xff]
  %v173 = vld [vmem:[%s165 + $0x38] sm:$0xff]
  %v174 = vld [vmem:[%s165 + $0x40] sm:$0xff]
  %v175 = vld [vmem:[%s165 + $0x48] sm:$0xff]
  %v176 = vld [vmem:[%s165 + $0x50] sm:$0xff]
  %v177 = vld [vmem:[%s165 + $0x58] sm:$0xff]
  %v178 = vld [vmem:[%s165 + $0x60] sm:$0xff]
  %v179 = vld [vmem:[%s165 + $0x68] sm:$0xff]
  %v180 = vld [vmem:[%s165 + $0x70] sm:$0xff]
  %v181 = vld [vmem:[%s165 + $0x78] sm:$0xff]
  %v182 = vld [vmem:[%s165 + $0x80] sm:$0xff]
  %v183 = vld [vmem:[%s165 + $0x88] sm:$0xff]
  %v184 = vld [vmem:[%s165 + $0x90] sm:$0x3f]
  %v186 = vsel %vm44, %v184, 0
  %188 = vmatpush.msra.mxu0 %v181
  %189 = vmatpush.msra.mxu0 %v180
  %190 = vmatpush.msra.mxu0 %v179
  %191 = vmatpush.msra.mxu0 %v178
  %192 = vmatpush.msra.mxu0 %v177
  %193 = vmatpush.msra.mxu0 %v176
  %194 = vmatpush.msra.mxu0 %v175
  %195 = vmatpush.msra.mxu0 %v174
  %196 = vmatpush.msra.mxu0 %v173
  %197 = vmatpush.msra.mxu0 %v172
  %198 = vmatpush.msra.mxu0 %v171
  %199 = vmatpush.msra.mxu0 %v170
  %200 = vmatpush.msra.mxu0 %v169
  %201 = vmatpush.msra.mxu0 %v168
  %202 = vmatpush.msra.mxu0 %v167
  %203 = vmatpush.msra.mxu0 %v166
  %204 = vmatmul.f32.gmra.mxu0 %v14
  %v205 = vpop.f32.mrf.mxu0
  %v206 = vadd.f32 0.0, %v205
  %207 = vmatmul.f32.gmra.mxu0 %v16
  %v208 = vpop.f32.mrf.mxu0
  %v209 = vadd.f32 0.0, %v208
  %210 = vdwg.mxu0
  %211 = vmatpush.msra.mxu0 0.0
  %212 = vmatpush.msra.mxu0 0.0
  %213 = vmatpush.msra.mxu0 0.0
  %214 = vmatpush.msra.mxu0 0.0
  %215 = vmatpush.msra.mxu0 0.0
  %216 = vmatpush.msra.mxu0 0.0
  %217 = vmatpush.msra.mxu0 0.0
  %218 = vmatpush.msra.mxu0 0.0
  %219 = vmatpush.msra.mxu0 0.0
  %220 = vmatpush.msra.mxu0 0.0
  %221 = vmatpush.msra.mxu0 0.0
  %222 = vmatpush.msra.mxu0 0.0
  %223 = vmatpush.msra.mxu0 0.0
  %224 = vmatpush.msra.mxu0 %v186
  %225 = vmatpush.msra.mxu0 %v183
  %226 = vmatpush.msra.mxu0 %v182
  %227 = vmatmul.f32.gmra.mxu0 %v39
  %v228 = vpop.f32.mrf.mxu0
  %v229 = vadd.f32 %v206, %v228
  %230 = vmatmul.f32.gmra.mxu0 %v42
  %v231 = vpop.f32.mrf.mxu0
  %v232 = vadd.f32 %v209, %v231
  %233 = vdwg.mxu0
  %v234 = vmax.f32 %v163, %v229
  %v235 = vmax.f32 %v164, %v232
  %s236 = scalar_lea.vmem %s0, 456
  %v237 = vld [vmem:[%s236] sm:$0xff]
  %v238 = vld [vmem:[%s236 + $0x8] sm:$0xff]
  %v239 = vld [vmem:[%s236 + $0x10] sm:$0xff]
  %v240 = vld [vmem:[%s236 + $0x18] sm:$0xff]
  %v241 = vld [vmem:[%s236 + $0x20] sm:$0xff]
  %v242 = vld [vmem:[%s236 + $0x28] sm:$0xff]
  %v243 = vld [vmem:[%s236 + $0x30] sm:$0xff]
  %v244 = vld [vmem:[%s236 + $0x38] sm:$0xff]
  %v245 = vld [vmem:[%s236 + $0x40] sm:$0xff]
  %v246 = vld [vmem:[%s236 + $0x48] sm:$0xff]
  %v247 = vld [vmem:[%s236 + $0x50] sm:$0xff]
  %v248 = vld [vmem:[%s236 + $0x58] sm:$0xff]
  %v249 = vld [vmem:[%s236 + $0x60] sm:$0xff]
  %v250 = vld [vmem:[%s236 + $0x68] sm:$0xff]
  %v251 = vld [vmem:[%s236 + $0x70] sm:$0xff]
  %v252 = vld [vmem:[%s236 + $0x78] sm:$0xff]
  %v253 = vld [vmem:[%s236 + $0x80] sm:$0xff]
  %v254 = vld [vmem:[%s236 + $0x88] sm:$0xff]
  %v255 = vld [vmem:[%s236 + $0x90] sm:$0x3f]
  %v257 = vsel %vm44, %v255, 0
  %259 = vmatpush.msra.mxu0 %v252
  %260 = vmatpush.msra.mxu0 %v251
  %261 = vmatpush.msra.mxu0 %v250
  %262 = vmatpush.msra.mxu0 %v249
  %263 = vmatpush.msra.mxu0 %v248
  %264 = vmatpush.msra.mxu0 %v247
  %265 = vmatpush.msra.mxu0 %v246
  %266 = vmatpush.msra.mxu0 %v245
  %267 = vmatpush.msra.mxu0 %v244
  %268 = vmatpush.msra.mxu0 %v243
  %269 = vmatpush.msra.mxu0 %v242
  %270 = vmatpush.msra.mxu0 %v241
  %271 = vmatpush.msra.mxu0 %v240
  %272 = vmatpush.msra.mxu0 %v239
  %273 = vmatpush.msra.mxu0 %v238
  %274 = vmatpush.msra.mxu0 %v237
  %275 = vmatmul.f32.gmra.mxu0 %v14
  %v276 = vpop.f32.mrf.mxu0
  %v277 = vadd.f32 0.0, %v276
  %278 = vmatmul.f32.gmra.mxu0 %v16
  %v279 = vpop.f32.mrf.mxu0
  %v280 = vadd.f32 0.0, %v279
  %281 = vdwg.mxu0
  %282 = vmatpush.msra.mxu0 0.0
  %283 = vmatpush.msra.mxu0 0.0
  %284 = vmatpush.msra.mxu0 0.0
  %285 = vmatpush.msra.mxu0 0.0
  %286 = vmatpush.msra.mxu0 0.0
  %287 = vmatpush.msra.mxu0 0.0
  %288 = vmatpush.msra.mxu0 0.0
  %289 = vmatpush.msra.mxu0 0.0
  %290 = vmatpush.msra.mxu0 0.0
  %291 = vmatpush.msra.mxu0 0.0
  %292 = vmatpush.msra.mxu0 0.0
  %293 = vmatpush.msra.mxu0 0.0
  %294 = vmatpush.msra.mxu0 0.0
  %295 = vmatpush.msra.mxu0 %v257
  %296 = vmatpush.msra.mxu0 %v254
  %297 = vmatpush.msra.mxu0 %v253
  %298 = vmatmul.f32.gmra.mxu0 %v39
  %v299 = vpop.f32.mrf.mxu0
  %v300 = vadd.f32 %v277, %v299
  %301 = vmatmul.f32.gmra.mxu0 %v42
  %v302 = vpop.f32.mrf.mxu0
  %v303 = vadd.f32 %v280, %v302
  %304 = vdwg.mxu0
  %v305 = vmax.f32 %v234, %v300
  %v306 = vmax.f32 %v235, %v303
  %v307 = vld [vmem:[%s2] sm:$0xff]
  %v308 = vld [vmem:[%s2 + $0x8] sm:$0xff]
  %310 = vset.pattern.permute.xlu0 0
  %311 = vperm.xlu0 %310, %v307
  %v312 = vpop.permute.xlu0 %311
  %315 = vset.pattern.permute.xlu0 0
  %316 = vperm.xlu0 %315, %v308
  %v317 = vpop.permute.xlu0 %316
  %v319 = vadd.f32 %v305, %v312
  %v320 = vadd.f32 %v306, %v317
  %v321 = vmax.f32 %v319, 0.0
  %v322 = vmax.f32 %v320, 0.0
  %vm323 = vcmask 408576
  %324 = vst.msk [vmem:[%s3] sm:$0xff] %vm323, %v321
  %325 = vst.msk [vmem:[%s3 + $0x8] sm:$0xff] %vm323, %v322
  // Predicated region
  $region14: #{model_forward.4} parent=0 // pred_check
    _
  $region15: #{model_forward.4} parent=0 // pred_check_branch
    %327 = sbr.rel (0) target = $region17
  $region16: #{model_forward.4} parent=0 // pred_region
    _
  $region17: #{model_forward.4} parent=0 // pred_fallthru
    _
  // Predicated region
  $region18: #{model_forward.4} parent=0 // pred_check
    _
  $region19: #{model_forward.4} parent=0 // pred_check_branch
    %329 = sbr.rel (0) target = $region21
  $region20: #{model_forward.4} parent=0 // pred_region
    _
  $region21: #{model_forward.4} parent=0 // pred_fallthru
    _

// kernel: model_forward.5
$region0: #{model_forward.5}
  #allocation0 [shape = 'u32[]', space=smem, size = 0x4, offset = 0x4, fixed_abs, tag = 'smem constant byte address 0x4 - core index']
  #allocation1 [shape = 'u32[72,128]{1,0:T(1,128)}', space=vmem, size = 0x9000, scoped, tag = 'internal scratch']
  %s0 = inlined_call_operand.vmem [shape: f32[2,400], index: 0, kind: input, shape index: {}]
  %s1 = inlined_call_operand.vmem [shape: f32[400,120], index: 1, kind: input, shape index: {}]
  %s2 = inlined_call_operand.vmem [shape: f32[1,120], index: 2, kind: input, shape index: {}]
  %s3 = inlined_call_operand.vmem [shape: f32[120,60], index: 3, kind: input, shape index: {}]
  %s4 = inlined_call_operand.vmem [shape: f32[1,60], index: 4, kind: input, shape index: {}]
  %s5 = inlined_call_operand.vmem [shape: f32[60,10], index: 5, kind: input, shape index: {}]
  %s6 = inlined_call_operand.vmem [shape: f32[1,10], index: 6, kind: input, shape index: {}]
  %s7 = inlined_call_operand.hbm [shape: f32[2,10], index: 7, kind: output, shape index: {}]
  %s8 = sld [smem:[#allocation0]]
  $region38: #{model_forward.5} parent=0
    _
  %s10 = ssub.s32 1, %s8
  %s11 = scalar_select 0, %s10, %s8
  $region1: #{model_forward.5} parent=0
    #allocation2 [shape = 'u8[1024]{0}', space=vmem, size = 0x400, scoped, tag = 'output window, operand 0, single buffered']
    #allocation3 [shape = 's32[1]{0}', space=sflag, size = 0x4, scoped, tag = 'scoped memory for model_forward.5']
    %12 = vsyncpa [#allocation3], 0
    // Predicated region
    $region2: #{model_forward.5} parent=1 // pred_check
      _
    $region3: #{model_forward.5} parent=1 // pred_check_branch
      %14 = sbr.rel (0) target = $region5
    $region4: #{model_forward.5} parent=1 // pred_region
      _
    $region5: #{model_forward.5} parent=1 // pred_fallthru
      _
    // Predicated region
    $region6: #{model_forward.5} parent=1 // pred_check
      _
    $region7: #{model_forward.5} parent=1 // pred_check_branch
      %16 = sbr.rel (0) target = $region9
    $region8: #{model_forward.5} parent=1 // pred_region
      _
    $region9: #{model_forward.5} parent=1 // pred_fallthru
      _
    // Predicated region
    $region10: #{model_forward.5} parent=1 // pred_check
      _
    $region11: #{model_forward.5} parent=1 // pred_check_branch
      %18 = sbr.rel (0) target = $region13
    $region12: #{model_forward.5} parent=1 // pred_region
      _
    $region13: #{model_forward.5} parent=1 // pred_fallthru
      _
    // Predicated region
    $region14: #{model_forward.5} parent=1 // pred_check
      _
    $region15: #{model_forward.5} parent=1 // pred_check_branch
      %20 = sbr.rel (0) target = $region17
    $region16: #{model_forward.5} parent=1 // pred_region
      _
    $region17: #{model_forward.5} parent=1 // pred_fallthru
      _
    // Predicated region
    $region18: #{model_forward.5} parent=1 // pred_check
      _
    $region19: #{model_forward.5} parent=1 // pred_check_branch
      %22 = sbr.rel (0) target = $region21
    $region20: #{model_forward.5} parent=1 // pred_region
      _
    $region21: #{model_forward.5} parent=1 // pred_fallthru
      _
    // Predicated region
    $region22: #{model_forward.5} parent=1 // pred_check
      _
    $region23: #{model_forward.5} parent=1 // pred_check_branch
      %24 = sbr.rel (0) target = $region25
    $region24: #{model_forward.5} parent=1 // pred_region
      _
    $region25: #{model_forward.5} parent=1 // pred_fallthru
      _
    // Predicated region
    $region26: #{model_forward.5} parent=1 // pred_check
      _
    $region27: #{model_forward.5} parent=1 // pred_check_branch
      %26 = sbr.rel (0) target = $region29
    $region28: #{model_forward.5} parent=1 // pred_region
      _
    $region29: #{model_forward.5} parent=1 // pred_fallthru
      _
    %v27 = vld [vmem:[%s0] sm:$0xff]
    %v28 = vld [vmem:[%s1] sm:$0xff]
    %v29 = vld [vmem:[%s1 + $0x8] sm:$0xff]
    %v30 = vld [vmem:[%s1 + $0x10] sm:$0xff]
    %v31 = vld [vmem:[%s1 + $0x18] sm:$0xff]
    %v32 = vld [vmem:[%s1 + $0x20] sm:$0xff]
    %v33 = vld [vmem:[%s1 + $0x28] sm:$0xff]
    %v34 = vld [vmem:[%s1 + $0x30] sm:$0xff]
    %v35 = vld [vmem:[%s1 + $0x38] sm:$0xff]
    %v36 = vld [vmem:[%s1 + $0x40] sm:$0xff]
    %v37 = vld [vmem:[%s1 + $0x48] sm:$0xff]
    %v38 = vld [vmem:[%s1 + $0x50] sm:$0xff]
    %v39 = vld [vmem:[%s1 + $0x58] sm:$0xff]
    %v40 = vld [vmem:[%s1 + $0x60] sm:$0xff]
    %v41 = vld [vmem:[%s1 + $0x68] sm:$0xff]
    %v42 = vld [vmem:[%s1 + $0x70] sm:$0xff]
    %v43 = vld [vmem:[%s1 + $0x78] sm:$0xff]
    %v44 = vld [vmem:[%s1 + $0x80] sm:$0xff]
    %v45 = vld [vmem:[%s1 + $0x88] sm:$0xff]
    %v46 = vld [vmem:[%s1 + $0x90] sm:$0xff]
    %v47 = vld [vmem:[%s1 + $0x98] sm:$0xff]
    %v48 = vld [vmem:[%s1 + $0xa0] sm:$0xff]
    %v49 = vld [vmem:[%s1 + $0xa8] sm:$0xff]
    %v50 = vld [vmem:[%s1 + $0xb0] sm:$0xff]
    %v51 = vld [vmem:[%s1 + $0xb8] sm:$0xff]
    %v52 = vld [vmem:[%s1 + $0xc0] sm:$0xff]
    %v53 = vld [vmem:[%s1 + $0xc8] sm:$0xff]
    %v54 = vld [vmem:[%s1 + $0xd0] sm:$0xff]
    %v55 = vld [vmem:[%s1 + $0xd8] sm:$0xff]
    %v56 = vld [vmem:[%s1 + $0xe0] sm:$0xff]
    %v57 = vld [vmem:[%s1 + $0xe8] sm:$0xff]
    %v58 = vld [vmem:[%s1 + $0xf0] sm:$0xff]
    %v59 = vld [vmem:[%s1 + $0xf8] sm:$0xff]
    %v60 = vld [vmem:[%s1 + $0x100] sm:$0xff]
    %v61 = vld [vmem:[%s1 + $0x108] sm:$0xff]
    %v62 = vld [vmem:[%s1 + $0x110] sm:$0xff]
    %v63 = vld [vmem:[%s1 + $0x118] sm:$0xff]
    %v64 = vld [vmem:[%s1 + $0x120] sm:$0xff]
    %v65 = vld [vmem:[%s1 + $0x128] sm:$0xff]
    %v66 = vld [vmem:[%s1 + $0x130] sm:$0xff]
    %v67 = vld [vmem:[%s1 + $0x138] sm:$0xff]
    %v68 = vld [vmem:[%s1 + $0x140] sm:$0xff]
    %v69 = vld [vmem:[%s1 + $0x148] sm:$0xff]
    %v70 = vld [vmem:[%s1 + $0x150] sm:$0xff]
    %v71 = vld [vmem:[%s1 + $0x158] sm:$0xff]
    %v72 = vld [vmem:[%s1 + $0x160] sm:$0xff]
    %v73 = vld [vmem:[%s1 + $0x168] sm:$0xff]
    %v74 = vld [vmem:[%s1 + $0x170] sm:$0xff]
    %v75 = vld [vmem:[%s1 + $0x178] sm:$0xff]
    %v76 = vld [vmem:[%s1 + $0x180] sm:$0xff]
    %v77 = vld [vmem:[%s1 + $0x188] sm:$0xff]
    %v78 = vld [vmem:[%s2] sm:$0x1]
    %v80 = vperm.slane %v78, 0
    %83 = vst [vmem:[#allocation1] ss:$4 sm:$0xff] %v27
    %v84 = vld.sshfl [vmem:[#allocation1] sm:$0xff pattern:$0x73625140]
    %v85 = vld.sshfl [vmem:[#allocation1 + $0x8] sm:$0xff pattern:$0x73625140]
    %v86 = vld.sshfl [vmem:[#allocation1 + $0x10] sm:$0xff pattern:$0x73625140]
    %v87 = vld.sshfl [vmem:[#allocation1 + $0x18] sm:$0xff pattern:$0x73625140]
    %vm91 = vcmask 130048
    %v92 = vsel %vm91, %v87, 0
    %94 = vmatpush.msra.mxu0 %v43
    %95 = vmatpush.msra.mxu0 %v42
    %96 = vmatpush.msra.mxu0 %v41
    %97 = vmatpush.msra.mxu0 %v40
    %98 = vmatpush.msra.mxu0 %v39
    %99 = vmatpush.msra.mxu0 %v38
    %100 = vmatpush.msra.mxu0 %v37
    %101 = vmatpush.msra.mxu0 %v36
    %102 = vmatpush.msra.mxu0 %v35
    %103 = vmatpush.msra.mxu0 %v34
    %104 = vmatpush.msra.mxu0 %v33
    %105 = vmatpush.msra.mxu0 %v32
    %106 = vmatpush.msra.mxu0 %v31
    %107 = vmatpush.msra.mxu0 %v30
    %108 = vmatpush.msra.mxu0 %v29
    %109 = vmatpush.msra.mxu0 %v28
    %110 = vmatmul.f32.gmra.mxu0 %v84
    %v111 = vpop.f32.mrf.mxu0
    %v112 = vadd.f32 %v80, %v111
    %113 = vdwg.mxu0
    %114 = vmatpush.msra.mxu0 %v59
    %115 = vmatpush.msra.mxu0 %v58
    %116 = vmatpush.msra.mxu0 %v57
    %117 = vmatpush.msra.mxu0 %v56
    %118 = vmatpush.msra.mxu0 %v55
    %119 = vmatpush.msra.mxu0 %v54
    %120 = vmatpush.msra.mxu0 %v53
    %121 = vmatpush.msra.mxu0 %v52
    %122 = vmatpush.msra.mxu0 %v51
    %123 = vmatpush.msra.mxu0 %v50
    %124 = vmatpush.msra.mxu0 %v49
    %125 = vmatpush.msra.mxu0 %v48
    %126 = vmatpush.msra.mxu0 %v47
    %127 = vmatpush.msra.mxu0 %v46
    %128 = vmatpush.msra.mxu0 %v45
    %129 = vmatpush.msra.mxu0 %v44
    %130 = vmatmul.f32.gmra.mxu0 %v85
    %v131 = vpop.f32.mrf.mxu0
    %v132 = vadd.f32 %v112, %v131
    %133 = vdwg.mxu0
    %134 = vmatpush.msra.mxu0 %v75
    %135 = vmatpush.msra.mxu0 %v74
    %136 = vmatpush.msra.mxu0 %v73
    %137 = vmatpush.msra.mxu0 %v72
    %138 = vmatpush.msra.mxu0 %v71
    %139 = vmatpush.msra.mxu0 %v70
    %140 = vmatpush.msra.mxu0 %v69
    %141 = vmatpush.msra.mxu0 %v68
    %142 = vmatpush.msra.mxu0 %v67
    %143 = vmatpush.msra.mxu0 %v66
    %144 = vmatpush.msra.mxu0 %v65
    %145 = vmatpush.msra.mxu0 %v64
    %146 = vmatpush.msra.mxu0 %v63
    %147 = vmatpush.msra.mxu0 %v62
    %148 = vmatpush.msra.mxu0 %v61
    %149 = vmatpush.msra.mxu0 %v60
    %150 = vmatmul.f32.gmra.mxu0 %v86
    %v151 = vpop.f32.mrf.mxu0
    %v152 = vadd.f32 %v132, %v151
    %153 = vdwg.mxu0
    %154 = vmatpush.msra.mxu0 0.0
    %155 = vmatpush.msra.mxu0 0.0
    %156 = vmatpush.msra.mxu0 0.0
    %157 = vmatpush.msra.mxu0 0.0
    %158 = vmatpush.msra.mxu0 0.0
    %159 = vmatpush.msra.mxu0 0.0
    %160 = vmatpush.msra.mxu0 0.0
    %161 = vmatpush.msra.mxu0 0.0
    %162 = vmatpush.msra.mxu0 0.0
    %163 = vmatpush.msra.mxu0 0.0
    %164 = vmatpush.msra.mxu0 0.0
    %165 = vmatpush.msra.mxu0 0.0
    %166 = vmatpush.msra.mxu0 0.0
    %167 = vmatpush.msra.mxu0 0.0
    %168 = vmatpush.msra.mxu0 %v77
    %169 = vmatpush.msra.mxu0 %v76
    %170 = vmatmul.f32.gmra.mxu0 %v92
    %v171 = vpop.f32.mrf.mxu0
    %v172 = vadd.f32 %v152, %v171
    %173 = vdwg.mxu0
    %v174 = vmax.f32 %v172, 0.0
    %v175 = vld [vmem:[%s3] sm:$0xff]
    %v176 = vld [vmem:[%s3 + $0x8] sm:$0xff]
    %v177 = vld [vmem:[%s3 + $0x10] sm:$0xff]
    %v178 = vld [vmem:[%s3 + $0x18] sm:$0xff]
    %v179 = vld [vmem:[%s3 + $0x20] sm:$0xff]
    %v180 = vld [vmem:[%s3 + $0x28] sm:$0xff]
    %v181 = vld [vmem:[%s3 + $0x30] sm:$0xff]
    %v182 = vld [vmem:[%s3 + $0x38] sm:$0xff]
    %v183 = vld [vmem:[%s3 + $0x40] sm:$0xff]
    %v184 = vld [vmem:[%s3 + $0x48] sm:$0xff]
    %v185 = vld [vmem:[%s3 + $0x50] sm:$0xff]
    %v186 = vld [vmem:[%s3 + $0x58] sm:$0xff]
    %v187 = vld [vmem:[%s3 + $0x60] sm:$0xff]
    %v188 = vld [vmem:[%s3 + $0x68] sm:$0xff]
    %v189 = vld [vmem:[%s3 + $0x70] sm:$0xff]
    %v190 = vld [vmem:[%s4] sm:$0x1]
    %v192 = vperm.slane %v190, 0
    %vm194 = vcmask 982016
    %v196 = vsel %vm194, %v174, 0
    %198 = vmatpush.msra.mxu0 0.0
    %199 = vmatpush.msra.mxu0 %v189
    %200 = vmatpush.msra.mxu0 %v188
    %201 = vmatpush.msra.mxu0 %v187
    %202 = vmatpush.msra.mxu0 %v186
    %203 = vmatpush.msra.mxu0 %v185
    %204 = vmatpush.msra.mxu0 %v184
    %205 = vmatpush.msra.mxu0 %v183
    %206 = vmatpush.msra.mxu0 %v182
    %207 = vmatpush.msra.mxu0 %v181
    %208 = vmatpush.msra.mxu0 %v180
    %209 = vmatpush.msra.mxu0 %v179
    %210 = vmatpush.msra.mxu0 %v178
    %211 = vmatpush.msra.mxu0 %v177
    %212 = vmatpush.msra.mxu0 %v176
    %213 = vmatpush.msra.mxu0 %v175
    %214 = vmatmul.f32.gmra.mxu0 %v196
    %v215 = vpop.f32.mrf.mxu0
    %v216 = vadd.f32 %v192, %v215
    %217 = vdwg.mxu0
    %v218 = vmax.f32 %v216, 0.0
    %v219 = vld [vmem:[%s5] sm:$0xff]
    %v220 = vld [vmem:[%s5 + $0x8] sm:$0xff]
    %v221 = vld [vmem:[%s5 + $0x10] sm:$0xff]
    %v222 = vld [vmem:[%s5 + $0x18] sm:$0xff]
    %v223 = vld [vmem:[%s5 + $0x20] sm:$0xff]
    %v224 = vld [vmem:[%s5 + $0x28] sm:$0xff]
    %v225 = vld [vmem:[%s5 + $0x30] sm:$0xff]
    %v226 = vld [vmem:[%s5 + $0x38] sm:$0xf]
    %v227 = vld [vmem:[%s6] sm:$0x1]
    %v229 = vperm.slane %v227, 0
    %vm231 = vcmask 490496
    %v233 = vsel %vm231, %v218, 0
    %vm235 = vcmask 1043456
    %v237 = vsel %vm235, %v226, 0
    %239 = vmatpush.msra.mxu0 0.0
    %240 = vmatpush.msra.mxu0 0.0
    %241 = vmatpush.msra.mxu0 0.0
    %242 = vmatpush.msra.mxu0 0.0
    %243 = vmatpush.msra.mxu0 0.0
    %244 = vmatpush.msra.mxu0 0.0
    %245 = vmatpush.msra.mxu0 0.0
    %246 = vmatpush.msra.mxu0 0.0
    %247 = vmatpush.msra.mxu0 %v237
    %248 = vmatpush.msra.mxu0 %v225
    %249 = vmatpush.msra.mxu0 %v224
    %250 = vmatpush.msra.mxu0 %v223
    %251 = vmatpush.msra.mxu0 %v222
    %252 = vmatpush.msra.mxu0 %v221
    %253 = vmatpush.msra.mxu0 %v220
    %254 = vmatpush.msra.mxu0 %v219
    %255 = vmatmul.f32.gmra.mxu0 %v233
    %v256 = vpop.f32.mrf.mxu0
    %v257 = vadd.f32 %v229, %v256
    %258 = vdwg.mxu0
    %vm259 = vcmask 74752
    %260 = vst.msk [vmem:[#allocation2] sm:$0x3] %vm259, %v257
    // Predicated region
    $region30: #{model_forward.5} parent=1 // pred_check
      _
    $region31: #{model_forward.5} parent=1 // pred_check_branch
      %262 = sbr.rel (0) target = $region33
    $region32: #{model_forward.5} parent=1 // pred_region
      %264 = vsyncadd [#allocation3], 0
      %s266 = sshll.u32 [#allocation2], 4
      %s267 = int_to_ptr.vmem [resolvable:$true] %s266
      %s268 = sshll.u32 %s7, 4
      %s269 = int_to_ptr.hbm [resolvable:$true] %s268
      %271 = dma.vmem_to_hbm [thread:$0]  %s267, 32, %s269, [#allocation3]
    $region33: #{model_forward.5} parent=1 // pred_fallthru
      _
    // Predicated region
    $region34: #{model_forward.5} parent=1 // pred_check
      _
    $region35: #{model_forward.5} parent=1 // pred_check_branch
      %273 = sbr.rel (0) target = $region37
    $region36: #{model_forward.5} parent=1 // pred_region
      %275 = dma.done [#allocation3], 32
    $region37: #{model_forward.5} parent=1 // pred_fallthru
      _
    %276 = vsyncpa [#allocation3], 1

</llo_original>
